<compile_context>
chip_gen: v7x
topology: tpu7x:2x2x1
jax: 0.10.0
libtpu: 0.0.40
codegen_flags: <defaults>
</compile_context>

<pallas_src>
import jax
import jax.numpy as jnp
from jax import lax
from jax.experimental import pallas as pl
from jax.experimental.pallas import tpu as pltpu

# ---- configuration (mirrors the PyTorch module's __init__ args) ----
D_IN = 8            # input_dim
H = 32              # hidden_dim
D_OUT = 4           # output_dim
L = 3               # args.num_layers

N_PER_GRAPH = 16    # nodes per graph
GRAPHS_PER_BLOCK = 8
NUM_BLOCKS = 2      # grid size (parallel axis)
NUM_GRAPHS = GRAPHS_PER_BLOCK * NUM_BLOCKS           # 16 graphs
NODES_PER_BLOCK = GRAPHS_PER_BLOCK * N_PER_GRAPH     # 128 nodes -> M = 128
LANES = 128                                          # data-slab lane width
E_PER_GRAPH = 40                                     # directed edges per graph

N_BIAS = 3 + L                                       # pre, conv x L, p1, p2
D_ROWS = 2 * NODES_PER_BLOCK + GRAPHS_PER_BLOCK      # A_hat | x_pad | pool rows
W_ROWS = NODES_PER_BLOCK + H * (L * (L + 1) // 2) + H * (L + 1) + H   # 480

NEG_BIG = -1e30     # mask value for padded logit columns

assert NODES_PER_BLOCK == LANES


def make_kernel(num_layers, hidden, d_out, n_block, g_block):
    """Fused forward for one block of graphs (GCN convs, skip='all', eval mode)."""

    def kernel(data_ref, w_ref, b_ref, out_ref):
        # --- unpack the per-block data slab (all bf16, 128-lane rows) ---
        a_hat = data_ref[0:n_block, :]                              # (128, 128)
        x_full = data_ref[n_block:2 * n_block, :]                   # (128, 128) x zero-padded to 128 cols
        pool = data_ref[2 * n_block:2 * n_block + g_block, :]       # (8, 128) one-hot pooling

        biases = b_ref[...]                                         # (6, 32) f32

        # pre_mp: Linear(input_dim, hidden); K=128 (x padded), lane-dense.
        h0 = jnp.dot(x_full, w_ref[0:n_block, :],
                     preferred_element_type=jnp.float32) + biases[0:1, :]
        emb = h0.astype(jnp.bfloat16)        # running lane-concat [h0], width 32

        row = n_block
        for i in range(num_layers):
            k = hidden * (i + 1)
            # GCNConv(emb, edge_index): A_hat @ (emb @ W_i) + b_i
            # single concat-dot against the contiguous layer-i weight block
            xw = jnp.dot(emb, w_ref[row:row + k, :],
                         preferred_element_type=jnp.float32)        # (128, 32)
            row += k
            agg = jnp.dot(a_hat, xw.astype(jnp.bfloat16),
                          preferred_element_type=jnp.float32) + biases[1 + i:2 + i, :]
            h = jnp.maximum(agg, 0.0)        # F.relu; F.dropout (eval) -> identity
            emb = jnp.concatenate([emb, h.astype(jnp.bfloat16)], axis=-1)

        # emb is now (128, 128) = [h0|h1|h2|h3] (one bf16 vreg row width).
        # global_add_pool fused with the first post_mp Linear:
        #   (P @ emb) @ W_p1 with a single K=128 contraction each.
        pooled = jnp.dot(pool, emb, preferred_element_type=jnp.float32)      # (8, 128)
        kp1 = hidden * (num_layers + 1)
        h1 = jnp.dot(pooled.astype(jnp.bfloat16), w_ref[row:row + kp1, :],
                     preferred_element_type=jnp.float32) + biases[1 + num_layers:2 + num_layers, :]
        row += kp1
        # Dropout (eval, identity) -> LeakyReLU(0.1)
        h1 = jnp.where(h1 > 0, h1, 0.1 * h1)

        # final Linear (output cols padded to H; pads masked out of the softmax)
        logits = jnp.dot(h1.astype(jnp.bfloat16), w_ref[row:row + hidden, :],
                         preferred_element_type=jnp.float32) + biases[2 + num_layers:3 + num_layers, :]
        colids = lax.broadcasted_iota(jnp.int32, logits.shape, 1)
        masked = jnp.where(colids < d_out, logits, NEG_BIG)

        # log_softmax(dim=1), numerically stable; full (8, 32) block store.
        m = jnp.max(masked, axis=1, keepdims=True)
        lse = m + jnp.log(jnp.sum(jnp.exp(masked - m), axis=1, keepdims=True))
        out_ref[...] = masked - lse

    return kernel


def pack_params(params):
    """One bf16 row-blocked weight slab (480, 32) + one f32 bias slab (6, 32)."""
    (w_pre, b_pre, conv_params, w_p1, b_p1, w_p2, b_p2) = params

    # pre_mp weight padded to 128 rows so the pre_mp contraction is K=128.
    w_pre_pad = jnp.zeros((NODES_PER_BLOCK, H), jnp.float32).at[:D_IN, :].set(w_pre)
    blocks = [w_pre_pad]
    for (w_i, _) in conv_params:          # W_i : (H*(i+1), H), contiguous
        blocks.append(w_i)
    blocks.append(w_p1)                   # (H*(L+1), H)
    w_p2_pad = jnp.zeros((H, H), jnp.float32).at[:, :D_OUT].set(w_p2)
    blocks.append(w_p2_pad)
    w_slab = jnp.concatenate(blocks, axis=0).astype(jnp.bfloat16)   # (480, 32)

    b_p2_pad = jnp.zeros((1, H), jnp.float32).at[:, :D_OUT].set(b_p2)
    b_slab = jnp.concatenate(
        [b_pre] + [b for (_, b) in conv_params] + [b_p1, b_p2_pad], axis=0
    ).astype(jnp.float32)                                           # (6, 32)
    return w_slab, b_slab


def build_block_inputs(x, edge_index, batch):
    """Dense GCN-normalized adjacency + pooling matrix + padded x, packed into
    one bf16 slab per graph block (edges never cross graphs, so the per-block
    block-diagonal of the global A_hat is exact)."""
    n_total = x.shape[0]

    # --- GCN normalization with self-loops (matches pyg GCNConv gcn_norm) ---
    self_loop = jnp.arange(n_total, dtype=edge_index.dtype)
    row = jnp.concatenate([edge_index[0], self_loop])   # sources  j
    col = jnp.concatenate([edge_index[1], self_loop])   # targets  i
    deg = jnp.zeros((n_total,), jnp.float32).at[col].add(1.0)
    dinv = jnp.where(deg > 0, deg ** -0.5, 0.0)
    norm = dinv[row] * dinv[col]
    a_full = jnp.zeros((n_total, n_total), jnp.float32).at[col, row].add(norm)

    # --- global_add_pool as a one-hot pooling matrix P [NUM_GRAPHS, n_total] ---
    pool_full = (batch[None, :] ==
                 jnp.arange(NUM_GRAPHS, dtype=batch.dtype)[:, None]).astype(jnp.float32)

    # zero-pad node features to 128 columns (lane-dense pre_mp contraction)
    x_pad = jnp.zeros((n_total, LANES), jnp.float32).at[:, :D_IN].set(x)

    blocks = []
    for b in range(NUM_BLOCKS):
        r0 = b * NODES_PER_BLOCK
        g0 = b * GRAPHS_PER_BLOCK
        a_b = a_full[r0:r0 + NODES_PER_BLOCK, r0:r0 + NODES_PER_BLOCK]   # (128, 128)
        x_b = x_pad[r0:r0 + NODES_PER_BLOCK, :]                          # (128, 128)
        p_b = pool_full[g0:g0 + GRAPHS_PER_BLOCK, r0:r0 + NODES_PER_BLOCK]  # (8, 128)
        blocks.append(jnp.concatenate([a_b, x_b, p_b], axis=0))          # (264, 128)
    return jnp.stack(blocks, axis=0).astype(jnp.bfloat16)                # (2, 264, 128)


def skip_last_gnn_forward(x, edge_index, batch, params):
    data = build_block_inputs(x, edge_index, batch)       # (NUM_BLOCKS, 264, 128) bf16
    w_slab, b_slab = pack_params(params)                  # (480, 32) bf16 / (6, 32) f32

    # TODO(synk): for a repeated-inference loop, keep the weight slab resident
    # across calls (cross-pallas_call prefetch); single-call demo skips it.
    out = pl.pallas_call(
        make_kernel(L, H, D_OUT, NODES_PER_BLOCK, GRAPHS_PER_BLOCK),
        out_shape=jax.ShapeDtypeStruct((NUM_BLOCKS, GRAPHS_PER_BLOCK, H), jnp.float32),
        grid=(NUM_BLOCKS,),
        in_specs=[
            pl.BlockSpec((None, D_ROWS, LANES), lambda b: (b, 0, 0)),   # per-block data slab
            pl.BlockSpec((W_ROWS, H), lambda b: (0, 0)),                # shared weight slab
            pl.BlockSpec((N_BIAS, H), lambda b: (0, 0)),                # shared bias slab
        ],
        out_specs=pl.BlockSpec((None, GRAPHS_PER_BLOCK, H), lambda b: (b, 0, 0)),
        compiler_params=pltpu.CompilerParams(dimension_semantics=("parallel",)),
    )(data, w_slab, b_slab)

    # slice padded logits down to the real output width in the wrapper
    return out.reshape(NUM_GRAPHS, H)[:, :D_OUT]


def init_params(key):
    ks = jax.random.split(key, 4 + 2 * L)
    s = 0.1
    w_pre = s * jax.random.normal(ks[0], (D_IN, H), jnp.float32)
    b_pre = s * jax.random.normal(ks[1], (1, H), jnp.float32)
    conv_params = []
    for i in range(L):
        w_i = s * jax.random.normal(ks[2 + 2 * i], (H * (i + 1), H), jnp.float32)
        b_i = s * jax.random.normal(ks[3 + 2 * i], (1, H), jnp.float32)
        conv_params.append((w_i, b_i))
    w_p1 = s * jax.random.normal(ks[2 + 2 * L], (H * (L + 1), H), jnp.float32)
    b_p1 = jnp.zeros((1, H), jnp.float32)
    w_p2 = s * jax.random.normal(ks[3 + 2 * L], (H, D_OUT), jnp.float32)
    b_p2 = jnp.zeros((1, D_OUT), jnp.float32)
    return (w_pre, b_pre, conv_params, w_p1, b_p1, w_p2, b_p2)


if __name__ == "__main__":
    key = jax.random.PRNGKey(0)
    k_x, k_src, k_off, k_p = jax.random.split(key, 4)

    n_total = NUM_GRAPHS * N_PER_GRAPH          # 256 nodes, 16 graphs

    # node features
    x = jax.random.normal(k_x, (n_total, D_IN), jnp.float32)

    # random directed intra-graph edges, no self-loops
    src_local = jax.random.randint(k_src, (NUM_GRAPHS, E_PER_GRAPH), 0, N_PER_GRAPH,
                                   dtype=jnp.int32)
    off = jax.random.randint(k_off, (NUM_GRAPHS, E_PER_GRAPH), 1, N_PER_GRAPH,
                             dtype=jnp.int32)
    dst_local = (src_local + off) % N_PER_GRAPH
    graph_off = (jnp.arange(NUM_GRAPHS, dtype=jnp.int32) * N_PER_GRAPH)[:, None]
    src = (src_local + graph_off).reshape(-1)
    dst = (dst_local + graph_off).reshape(-1)
    edge_index = jnp.stack([src, dst], axis=0)              # [2, NUM_GRAPHS*E_PER_GRAPH]

    # batch assignment: node -> graph id (16 nodes per graph)
    batch = jnp.repeat(jnp.arange(NUM_GRAPHS, dtype=jnp.int32), N_PER_GRAPH)

    params = init_params(k_p)

    out = skip_last_gnn_forward(x, edge_index, batch, params)
    out = jax.block_until_ready(out)

    assert out.shape == (NUM_GRAPHS, D_OUT)
    assert bool(jnp.all(jnp.isfinite(out)))
    # rows of log_softmax should (approximately) exp-sum to 1
    assert bool(jnp.allclose(jnp.sum(jnp.exp(out), axis=1), 1.0, atol=1e-4))
    print("KERNEL_OK")
</pallas_src>

<mosaic_0001>
module attributes {stable_mosaic.version = 11 : i64} {
  func.func @kernel(%arg0: i32, %arg1: memref<1x264x128xbf16, #tpu.memory_space<vmem>>, %arg2: memref<480x32xbf16, #tpu.memory_space<vmem>>, %arg3: memref<6x32xf32, #tpu.memory_space<vmem>>, %arg4: memref<1x8x32xf32, #tpu.memory_space<vmem>>) attributes {dimension_semantics = [#tpu.dimension_semantics<parallel>], iteration_bounds = array<i64: 2>, scalar_prefetch = 0 : i64, scratch_operands = 0 : i64, tpu.core_type = #tpu.core_type<tc>, window_params = [{transform_indices = @transform_0, window_bounds = array<i64: 1, 264, 128>}, {pipeline_mode = #tpu.pipeline_mode<synchronous>, transform_indices = @transform_1, window_bounds = array<i64: 480, 32>}, {pipeline_mode = #tpu.pipeline_mode<synchronous>, transform_indices = @transform_2, window_bounds = array<i64: 6, 32>}, {transform_indices = @transform_3, window_bounds = array<i64: 1, 8, 32>}]} {
    %c0 = arith.constant 0 : index
    %c0_0 = arith.constant 0 : index
    %c0_1 = arith.constant 0 : index
    %0 = vector.load %arg1[%c0, %c0_0, %c0_1] : memref<1x264x128xbf16, #tpu.memory_space<vmem>>, vector<1x128x128xbf16>
    %1 = vector.shape_cast %0 : vector<1x128x128xbf16> to vector<128x128xbf16>
    %c0_2 = arith.constant 0 : index
    %c128 = arith.constant 128 : index
    %c0_3 = arith.constant 0 : index
    %2 = vector.load %arg1[%c0_2, %c128, %c0_3] : memref<1x264x128xbf16, #tpu.memory_space<vmem>>, vector<1x128x128xbf16>
    %3 = vector.shape_cast %2 : vector<1x128x128xbf16> to vector<128x128xbf16>
    %c0_4 = arith.constant 0 : index
    %c256 = arith.constant 256 : index
    %c0_5 = arith.constant 0 : index
    %4 = vector.load %arg1[%c0_4, %c256, %c0_5] : memref<1x264x128xbf16, #tpu.memory_space<vmem>>, vector<1x8x128xbf16>
    %5 = vector.shape_cast %4 : vector<1x8x128xbf16> to vector<8x128xbf16>
    %c0_6 = arith.constant 0 : index
    %c0_7 = arith.constant 0 : index
    %6 = vector.load %arg3[%c0_6, %c0_7] : memref<6x32xf32, #tpu.memory_space<vmem>>, vector<6x32xf32>
    %c0_8 = arith.constant 0 : index
    %c0_9 = arith.constant 0 : index
    %7 = vector.load %arg2[%c0_8, %c0_9] : memref<480x32xbf16, #tpu.memory_space<vmem>>, vector<128x32xbf16>
    %cst = arith.constant dense<0.000000e+00> : vector<128x32xf32>
    %8 = tpu.matmul %3, %7, %cst {dimension_numbers = #tpu.dot_dimension_numbers<[1], [0], [0], [1], [0, 0, 1, 1], [], []>} : vector<128x128xbf16>, vector<128x32xbf16>, vector<128x32xf32> -> vector<128x32xf32>
    %9 = vector.extract_strided_slice %6 {offsets = [0, 0], sizes = [1, 32], strides = [1, 1]} : vector<6x32xf32> to vector<1x32xf32>
    %10 = vector.broadcast %9 : vector<1x32xf32> to vector<128x32xf32>
    %11 = arith.addf %8, %10 : vector<128x32xf32>
    %12 = arith.truncf %11 : vector<128x32xf32> to vector<128x32xbf16>
    %c128_10 = arith.constant 128 : index
    %c0_11 = arith.constant 0 : index
    %13 = vector.load %arg2[%c128_10, %c0_11] : memref<480x32xbf16, #tpu.memory_space<vmem>>, vector<32x32xbf16>
    %cst_12 = arith.constant dense<0.000000e+00> : vector<128x32xf32>
    %14 = tpu.matmul %12, %13, %cst_12 {dimension_numbers = #tpu.dot_dimension_numbers<[1], [0], [0], [1], [0, 0, 1, 1], [], []>} : vector<128x32xbf16>, vector<32x32xbf16>, vector<128x32xf32> -> vector<128x32xf32>
    %15 = arith.truncf %14 : vector<128x32xf32> to vector<128x32xbf16>
    %cst_13 = arith.constant dense<0.000000e+00> : vector<128x32xf32>
    %16 = tpu.matmul %1, %15, %cst_13 {dimension_numbers = #tpu.dot_dimension_numbers<[1], [0], [0], [1], [0, 0, 1, 1], [], []>} : vector<128x128xbf16>, vector<128x32xbf16>, vector<128x32xf32> -> vector<128x32xf32>
    %17 = vector.extract_strided_slice %6 {offsets = [1, 0], sizes = [1, 32], strides = [1, 1]} : vector<6x32xf32> to vector<1x32xf32>
    %18 = vector.broadcast %17 : vector<1x32xf32> to vector<128x32xf32>
    %19 = arith.addf %16, %18 : vector<128x32xf32>
    %cst_14 = arith.constant 0.000000e+00 : f32
    %20 = vector.broadcast %cst_14 : f32 to vector<128x32xf32>
    %21 = arith.maximumf %19, %20 : vector<128x32xf32>
    %22 = arith.truncf %21 : vector<128x32xf32> to vector<128x32xbf16>
    %23 = tpu.concatenate %12, %22 in 1 : vector<128x32xbf16>, vector<128x32xbf16> -> vector<128x64xbf16>
    %c160 = arith.constant 160 : index
    %c0_15 = arith.constant 0 : index
    %24 = vector.load %arg2[%c160, %c0_15] : memref<480x32xbf16, #tpu.memory_space<vmem>>, vector<64x32xbf16>
    %cst_16 = arith.constant dense<0.000000e+00> : vector<128x32xf32>
    %25 = tpu.matmul %23, %24, %cst_16 {dimension_numbers = #tpu.dot_dimension_numbers<[1], [0], [0], [1], [0, 0, 1, 1], [], []>} : vector<128x64xbf16>, vector<64x32xbf16>, vector<128x32xf32> -> vector<128x32xf32>
    %26 = arith.truncf %25 : vector<128x32xf32> to vector<128x32xbf16>
    %cst_17 = arith.constant dense<0.000000e+00> : vector<128x32xf32>
    %27 = tpu.matmul %1, %26, %cst_17 {dimension_numbers = #tpu.dot_dimension_numbers<[1], [0], [0], [1], [0, 0, 1, 1], [], []>} : vector<128x128xbf16>, vector<128x32xbf16>, vector<128x32xf32> -> vector<128x32xf32>
    %28 = vector.extract_strided_slice %6 {offsets = [2, 0], sizes = [1, 32], strides = [1, 1]} : vector<6x32xf32> to vector<1x32xf32>
    %29 = vector.broadcast %28 : vector<1x32xf32> to vector<128x32xf32>
    %30 = arith.addf %27, %29 : vector<128x32xf32>
    %cst_18 = arith.constant 0.000000e+00 : f32
    %31 = vector.broadcast %cst_18 : f32 to vector<128x32xf32>
    %32 = arith.maximumf %30, %31 : vector<128x32xf32>
    %33 = arith.truncf %32 : vector<128x32xf32> to vector<128x32xbf16>
    %34 = tpu.concatenate %23, %33 in 1 : vector<128x64xbf16>, vector<128x32xbf16> -> vector<128x96xbf16>
    %c224 = arith.constant 224 : index
    %c0_19 = arith.constant 0 : index
    %35 = vector.load %arg2[%c224, %c0_19] : memref<480x32xbf16, #tpu.memory_space<vmem>>, vector<96x32xbf16>
    %cst_20 = arith.constant dense<0.000000e+00> : vector<128x32xf32>
    %36 = tpu.matmul %34, %35, %cst_20 {dimension_numbers = #tpu.dot_dimension_numbers<[1], [0], [0], [1], [0, 0, 1, 1], [], []>} : vector<128x96xbf16>, vector<96x32xbf16>, vector<128x32xf32> -> vector<128x32xf32>
    %37 = arith.truncf %36 : vector<128x32xf32> to vector<128x32xbf16>
    %cst_21 = arith.constant dense<0.000000e+00> : vector<128x32xf32>
    %38 = tpu.matmul %1, %37, %cst_21 {dimension_numbers = #tpu.dot_dimension_numbers<[1], [0], [0], [1], [0, 0, 1, 1], [], []>} : vector<128x128xbf16>, vector<128x32xbf16>, vector<128x32xf32> -> vector<128x32xf32>
    %39 = vector.extract_strided_slice %6 {offsets = [3, 0], sizes = [1, 32], strides = [1, 1]} : vector<6x32xf32> to vector<1x32xf32>
    %40 = vector.broadcast %39 : vector<1x32xf32> to vector<128x32xf32>
    %41 = arith.addf %38, %40 : vector<128x32xf32>
    %cst_22 = arith.constant 0.000000e+00 : f32
    %42 = vector.broadcast %cst_22 : f32 to vector<128x32xf32>
    %43 = arith.maximumf %41, %42 : vector<128x32xf32>
    %44 = arith.truncf %43 : vector<128x32xf32> to vector<128x32xbf16>
    %45 = tpu.concatenate %34, %44 in 1 : vector<128x96xbf16>, vector<128x32xbf16> -> vector<128x128xbf16>
    %cst_23 = arith.constant dense<0.000000e+00> : vector<8x128xf32>
    %46 = tpu.matmul %5, %45, %cst_23 {dimension_numbers = #tpu.dot_dimension_numbers<[1], [0], [0], [1], [0, 0, 1, 1], [], []>} : vector<8x128xbf16>, vector<128x128xbf16>, vector<8x128xf32> -> vector<8x128xf32>
    %47 = arith.truncf %46 : vector<8x128xf32> to vector<8x128xbf16>
    %c320 = arith.constant 320 : index
    %c0_24 = arith.constant 0 : index
    %48 = vector.load %arg2[%c320, %c0_24] : memref<480x32xbf16, #tpu.memory_space<vmem>>, vector<128x32xbf16>
    %cst_25 = arith.constant dense<0.000000e+00> : vector<8x32xf32>
    %49 = tpu.matmul %47, %48, %cst_25 {dimension_numbers = #tpu.dot_dimension_numbers<[1], [0], [0], [1], [0, 0, 1, 1], [], []>} : vector<8x128xbf16>, vector<128x32xbf16>, vector<8x32xf32> -> vector<8x32xf32>
    %50 = vector.extract_strided_slice %6 {offsets = [4, 0], sizes = [1, 32], strides = [1, 1]} : vector<6x32xf32> to vector<1x32xf32>
    %51 = vector.broadcast %50 : vector<1x32xf32> to vector<8x32xf32>
    %52 = arith.addf %49, %51 : vector<8x32xf32>
    %cst_26 = arith.constant 0.000000e+00 : f32
    %53 = vector.broadcast %cst_26 : f32 to vector<8x32xf32>
    %54 = arith.cmpf ogt, %52, %53 : vector<8x32xf32>
    %cst_27 = arith.constant 1.000000e-01 : f32
    %55 = vector.broadcast %cst_27 : f32 to vector<8x32xf32>
    %56 = arith.mulf %55, %52 : vector<8x32xf32>
    %57 = arith.select %54, %52, %56 : vector<8x32xi1>, vector<8x32xf32>
    %58 = arith.truncf %57 : vector<8x32xf32> to vector<8x32xbf16>
    %c448 = arith.constant 448 : index
    %c0_28 = arith.constant 0 : index
    %59 = vector.load %arg2[%c448, %c0_28] : memref<480x32xbf16, #tpu.memory_space<vmem>>, vector<32x32xbf16>
    %cst_29 = arith.constant dense<0.000000e+00> : vector<8x32xf32>
    %60 = tpu.matmul %58, %59, %cst_29 {dimension_numbers = #tpu.dot_dimension_numbers<[1], [0], [0], [1], [0, 0, 1, 1], [], []>} : vector<8x32xbf16>, vector<32x32xbf16>, vector<8x32xf32> -> vector<8x32xf32>
    %61 = vector.extract_strided_slice %6 {offsets = [5, 0], sizes = [1, 32], strides = [1, 1]} : vector<6x32xf32> to vector<1x32xf32>
    %62 = vector.broadcast %61 : vector<1x32xf32> to vector<8x32xf32>
    %63 = arith.addf %60, %62 : vector<8x32xf32>
    %64 = tpu.iota {dimensions = array<i32: 1>} : vector<8x32xi32>
    %c4_i32 = arith.constant 4 : i32
    %65 = vector.broadcast %c4_i32 : i32 to vector<8x32xi32>
    %66 = arith.cmpi slt, %64, %65 : vector<8x32xi32>
    %cst_30 = arith.constant -1.000000e+30 : f32
    %67 = vector.broadcast %cst_30 : f32 to vector<8x32xf32>
    %68 = arith.select %66, %63, %67 : vector<8x32xi1>, vector<8x32xf32>
    %cst_31 = arith.constant dense<0xFF800000> : vector<8xf32>
    %69 = vector.multi_reduction <maximumf>, %68, %cst_31 [1] : vector<8x32xf32> to vector<8xf32>
    %70 = vector.shape_cast %69 : vector<8xf32> to vector<8x1xf32>
    %71 = vector.broadcast %70 : vector<8x1xf32> to vector<8x32xf32>
    %72 = arith.subf %68, %71 : vector<8x32xf32>
    %73 = math.exp %72 : vector<8x32xf32>
    %cst_32 = arith.constant dense<0.000000e+00> : vector<8xf32>
    %74 = vector.multi_reduction <add>, %73, %cst_32 [1] : vector<8x32xf32> to vector<8xf32>
    %75 = vector.shape_cast %74 : vector<8xf32> to vector<8x1xf32>
    %76 = math.log %75 : vector<8x1xf32>
    %77 = arith.addf %70, %76 : vector<8x1xf32>
    %78 = vector.broadcast %77 : vector<8x1xf32> to vector<8x32xf32>
    %79 = arith.subf %68, %78 : vector<8x32xf32>
    %c0_33 = arith.constant 0 : index
    %c0_34 = arith.constant 0 : index
    %c0_35 = arith.constant 0 : index
    %80 = vector.load %arg4[%c0_33, %c0_34, %c0_35] : memref<1x8x32xf32, #tpu.memory_space<vmem>>, vector<1x8x32xf32>
    %81 = vector.shape_cast %80 : vector<1x8x32xf32> to vector<8x32xf32>
    %82 = vector.shape_cast %79 : vector<8x32xf32> to vector<1x8x32xf32>
    tpu.vector_store %arg4[%c0_33, %c0_34, %c0_35], %82 {strides = array<i32>} : memref<1x8x32xf32, #tpu.memory_space<vmem>>, vector<1x8x32xf32>,
    return
  }
  func.func @transform_0(%arg0: i32) -> (i32, i32, i32) {
    %c0_i32 = arith.constant 0 : i32
    %c0_i32_0 = arith.constant 0 : i32
    %c0_i32_1 = arith.constant 0 : i32
    return %arg0, %c0_i32, %c0_i32_0 : i32, i32, i32
  }
  func.func @transform_1(%arg0: i32) -> (i32, i32) {
    %c0_i32 = arith.constant 0 : i32
    %c0_i32_0 = arith.constant 0 : i32
    %c0_i32_1 = arith.constant 0 : i32
    return %c0_i32, %c0_i32_0 : i32, i32
  }
  func.func @transform_2(%arg0: i32) -> (i32, i32) {
    %c0_i32 = arith.constant 0 : i32
    %c0_i32_0 = arith.constant 0 : i32
    %c0_i32_1 = arith.constant 0 : i32
    return %c0_i32, %c0_i32_0 : i32, i32
  }
  func.func @transform_3(%arg0: i32) -> (i32, i32, i32) {
    %c0_i32 = arith.constant 0 : i32
    %c0_i32_0 = arith.constant 0 : i32
    %c0_i32_1 = arith.constant 0 : i32
    return %arg0, %c0_i32, %c0_i32_0 : i32, i32, i32
  }
}

</mosaic_0001>

<llo_original>
// kernel: tpu_custom_call.1
$region0: #{tpu_custom_call.1}
  #allocation0 [shape = 'u32[]', space=smem, size = 0x4, offset = 0x4, fixed_abs, tag = 'smem constant byte address 0x4 - core index']
  #allocation1 [shape = 'u32[144,128]{1,0:T(1,128)}', space=vmem, size = 0x12000, scoped, tag = 'internal scratch']
  %s0 = inlined_call_operand.vmem [shape: bf16[2,264,128], index: 0, kind: input, shape index: {}]
  %s1 = inlined_call_operand.vmem [shape: bf16[480,32], index: 1, kind: input, shape index: {}]
  %s2 = inlined_call_operand.vmem [shape: f32[6,32], index: 2, kind: input, shape index: {}]
  %s3 = inlined_call_operand.hbm [shape: f32[2,8,32], index: 3, kind: output, shape index: {}]
  %s4 = sld [smem:[#allocation0]]
  $region45: #{tpu_custom_call.1} parent=0
    _
  %s6 = ssub.s32 1, %s4
  %s7 = scalar_select 0, %s6, %s4
  $region1: #{tpu_custom_call.1} parent=0
    #allocation2 [shape = 'u8[8192]{0}', space=vmem, size = 0x2000, scoped, tag = 'output window, operand 0']
    #allocation3 [shape = 's32[2]{0}', space=sflag, size = 0x8, scoped, tag = 'scoped memory for tpu_custom_call.1']
    %8 = vsyncpa [#allocation3], 0
    %s9 = scalar_lea.sflag [#allocation3], 1
    %10 = vsyncpa %s9, 0
    loop: start=0, step=1, limit=4
    $region2: #{tpu_custom_call.1} parent=1 // loop_pre_header
      _
    $region3: #{tpu_custom_call.1} parent=1 // loop_header
      %s12 = sphi 0, %s16
      %p13 = scmp.ge.s32.totalorder %s12, 4
      %s22 = sphi 0, %s24
      %s25 = sphi 0, %s22
      %s26 = sphi 0, %s25
      %s42 = sphi 0, %s26
      %s46 = sphi 0, %s46
      %s48 = sphi 0, %s46
      %s49 = sphi 0, %s48
      %s63 = sphi 0, %s49
      %s67 = sphi 0, %s67
      %s69 = sphi 0, %s67
      %s70 = sphi 0, %s69
      %s84 = sphi 0, %s70
      %s90 = sphi 0, %s92
      %s93 = sphi 0, %s90
      %s94 = sphi 0, %s93
      %s110 = sphi 0, %s94
    $region4: #{tpu_custom_call.1} parent=1 // loop_header_branch
      %15 = sbr.rel (%p13) target = $region8
    $region5: #{tpu_custom_call.1} parent=1 // loop_body
      %s17 = ssub.s32 %s12, 1
      %s18 = ssub.s32 %s12, 2
      %s19 = sadd.s32 %s12, 1
      %s20 = ssub.s32 %s12, %s19
      %p21 = scmp.eq.s32.totalorder %s20, 0
      %s23 = sadd.s32 %s22, 1
      %s24 = scalar_select %p21, %s22, %s23
      %p27 = pneg %p21
      %p28 = scmp.eq.s32.totalorder %s12, 1
      %p29 = por %p27, %p28
      %p30 = scmp.ne.s32.totalorder %s22, %s25
      %p31 = scmp.eq.s32.totalorder %s12, 0
      %p32 = por %p30, %p31
      %p33 = scmp.ne.s32.totalorder %s22, %s25
      %p34 = scmp.eq.s32.totalorder %s17, 1
      %p35 = por %p33, %p34
      %p36 = scmp.ne.s32.totalorder %s25, %s26
      %p37 = scmp.eq.s32.totalorder %s17, 0
      %p38 = por %p36, %p37
      %p39 = scmp.ne.s32.totalorder %s25, %s26
      %p40 = scmp.eq.s32.totalorder %s18, 1
      %p41 = por %p39, %p40
      %p43 = scmp.ne.s32.totalorder %s26, %s42
      %p44 = scmp.eq.s32.totalorder %s18, 0
      %p45 = por %p43, %p44
      %s47 = sadd.s32 %s46, 1
      %p50 = scmp.eq.s32.totalorder %s12, 1
      %p51 = scmp.ne.s32.totalorder %s46, %s48
      %p52 = scmp.eq.s32.totalorder %s12, 0
      %p53 = por %p51, %p52
      %p54 = scmp.ne.s32.totalorder %s46, %s48
      %p55 = scmp.eq.s32.totalorder %s17, 1
      %p56 = por %p54, %p55
      %p57 = scmp.ne.s32.totalorder %s48, %s49
      %p58 = scmp.eq.s32.totalorder %s17, 0
      %p59 = por %p57, %p58
      %p60 = scmp.ne.s32.totalorder %s48, %s49
      %p61 = scmp.eq.s32.totalorder %s18, 1
      %p62 = por %p60, %p61
      %p64 = scmp.ne.s32.totalorder %s49, %s63
      %p65 = scmp.eq.s32.totalorder %s18, 0
      %p66 = por %p64, %p65
      %s68 = sadd.s32 %s67, 1
      %p71 = scmp.eq.s32.totalorder %s12, 1
      %p72 = scmp.ne.s32.totalorder %s67, %s69
      %p73 = scmp.eq.s32.totalorder %s12, 0
      %p74 = por %p72, %p73
      %p75 = scmp.ne.s32.totalorder %s67, %s69
      %p76 = scmp.eq.s32.totalorder %s17, 1
      %p77 = por %p75, %p76
      %p78 = scmp.ne.s32.totalorder %s69, %s70
      %p79 = scmp.eq.s32.totalorder %s17, 0
      %p80 = por %p78, %p79
      %p81 = scmp.ne.s32.totalorder %s69, %s70
      %p82 = scmp.eq.s32.totalorder %s18, 1
      %p83 = por %p81, %p82
      %p85 = scmp.ne.s32.totalorder %s70, %s84
      %p86 = scmp.eq.s32.totalorder %s18, 0
      %p87 = por %p85, %p86
      %s88 = ssub.s32 %s12, %s19
      %p89 = scmp.eq.s32.totalorder %s88, 0
      %s91 = sadd.s32 %s90, 1
      %s92 = scalar_select %p89, %s90, %s91
      %p95 = pneg %p89
      %p96 = scmp.eq.s32.totalorder %s12, 1
      %p97 = por %p95, %p96
      %p98 = scmp.ne.s32.totalorder %s90, %s93
      %p99 = scmp.eq.s32.totalorder %s12, 0
      %p100 = por %p98, %p99
      %p101 = scmp.ne.s32.totalorder %s90, %s93
      %p102 = scmp.eq.s32.totalorder %s17, 1
      %p103 = por %p101, %p102
      %p104 = scmp.ne.s32.totalorder %s93, %s94
      %p105 = scmp.eq.s32.totalorder %s17, 0
      %p106 = por %p104, %p105
      %p107 = scmp.ne.s32.totalorder %s93, %s94
      %p108 = scmp.eq.s32.totalorder %s18, 1
      %p109 = por %p107, %p108
      %p111 = scmp.ne.s32.totalorder %s94, %s110
      %p112 = scmp.eq.s32.totalorder %s18, 0
      %p113 = por %p111, %p112
      %p114 = scmp.le.s32.totalorder 1, %s12
      %p115 = scmp.lt.s32.totalorder %s12, 3
      %p116 = pnand %p114, %p115
      %p117 = pneg %p116
      // Predicated region
      $region9: #{tpu_custom_call.1} parent=5 // pred_check
        _
      $region10: #{tpu_custom_call.1} parent=5 // pred_check_branch
        %119 = sbr.rel (%p116) target = $region12
      $region11: #{tpu_custom_call.1} parent=5 // pred_region
        %s120 = ssub.s32 %s12, 1
        // Predicated region
        $region13: #{tpu_custom_call.1} parent=11 // pred_check
          %p121 = pneg %p59
        $region14: #{tpu_custom_call.1} parent=11 // pred_check_branch
          %123 = sbr.rel (%p121) target = $region16
        $region15: #{tpu_custom_call.1} parent=11 // pred_region
          _
        $region16: #{tpu_custom_call.1} parent=11 // pred_fallthru
          _
        // Predicated region
        $region17: #{tpu_custom_call.1} parent=11 // pred_check
          %p124 = pneg %p80
        $region18: #{tpu_custom_call.1} parent=11 // pred_check_branch
          %126 = sbr.rel (%p124) target = $region20
        $region19: #{tpu_custom_call.1} parent=11 // pred_region
          _
        $region20: #{tpu_custom_call.1} parent=11 // pred_fallthru
          _
      $region12: #{tpu_custom_call.1} parent=5 // pred_fallthru
        _
      %p127 = scmp.lt.s32.totalorder %s12, 2
      // Predicated region
      $region21: #{tpu_custom_call.1} parent=5 // pred_check
        %p128 = pneg %p127
      $region22: #{tpu_custom_call.1} parent=5 // pred_check_branch
        %130 = sbr.rel (%p128) target = $region24
      $region23: #{tpu_custom_call.1} parent=5 // pred_region
        // Predicated region
        $region25: #{tpu_custom_call.1} parent=23 // pred_check
          %p131 = pneg %p32
        $region26: #{tpu_custom_call.1} parent=23 // pred_check_branch
          %133 = sbr.rel (%p131) target = $region28
        $region27: #{tpu_custom_call.1} parent=23 // pred_region
          %p134 = scmp.lt.s32.totalorder %s12, 1
          %s135 = scalar_select %p134, %s12, 1
          %s136 = smul.addr %s135, 33
          %s137 = smul.addr %s136, 4
          %s138 = scalar_lea.vmem %s0, %s137
        $region28: #{tpu_custom_call.1} parent=23 // pred_fallthru
          _
      $region24: #{tpu_custom_call.1} parent=5 // pred_fallthru
        _
      %p139 = scmp.le.s32.totalorder 1, %s12
      %p140 = scmp.lt.s32.totalorder %s12, 3
      %p141 = pnand %p139, %p140
      %p142 = pneg %p141
      // Predicated region
      $region29: #{tpu_custom_call.1} parent=5 // pred_check
        _
      $region30: #{tpu_custom_call.1} parent=5 // pred_check_branch
        %144 = sbr.rel (%p141) target = $region32
      $region31: #{tpu_custom_call.1} parent=5 // pred_region
        %s145 = ssub.s32 %s12, 1
        %p146 = scmp.lt.s32.totalorder %s17, 1
        %s147 = scalar_select %p146, %s17, 1
        %s148 = smul.addr %s147, 33
        %s149 = smul.addr %s148, 4
        %s150 = scalar_lea.vmem %s0, %s149
        %p151 = pneg %p38
        %p152 = pneg %p35
        %p153 = pneg %p59
        %p154 = pneg %p56
        %p155 = pneg %p80
        %p156 = pneg %p77
        %p157 = pneg %p106
        %p158 = pneg %p103
        %s159 = sand.u32 %s93, 1
        %s160 = scalar_lea.sflag [#allocation3], %s159
        %s161 = sand.u32 %s93, 1
        %s162 = smul.addr %s161, 8
        %s163 = scalar_lea.vmem [#allocation2], %s162
        %p164 = scmp.lt.s32.totalorder %s17, 1
        %s165 = scalar_select %p164, %s17, 1
        %s166 = smul.addr %s165, 33
        %s167 = smul.addr %s166, 4
        %s168 = scalar_lea.vmem %s0, %s167
        %v170 = vld [vmem:[%s168] sm:$0xf]
        %v171 = vld [vmem:[%s168 + $0x4] sm:$0xf]
        %v172 = vld [vmem:[%s168 + $0x8] sm:$0xf]
        %v173 = vld [vmem:[%s168 + $0xc] sm:$0xf]
        %v174 = vld [vmem:[%s168 + $0x10] sm:$0xf]
        %v175 = vld [vmem:[%s168 + $0x14] sm:$0xf]
        %v176 = vld [vmem:[%s168 + $0x18] sm:$0xf]
        %v177 = vld [vmem:[%s168 + $0x1c] sm:$0xf]
        %v178 = vld [vmem:[%s168 + $0x20] sm:$0xf]
        %v179 = vld [vmem:[%s168 + $0x24] sm:$0xf]
        %v180 = vld [vmem:[%s168 + $0x28] sm:$0xf]
        %v181 = vld [vmem:[%s168 + $0x2c] sm:$0xf]
        %v182 = vld [vmem:[%s168 + $0x30] sm:$0xf]
        %v183 = vld [vmem:[%s168 + $0x34] sm:$0xf]
        %v184 = vld [vmem:[%s168 + $0x38] sm:$0xf]
        %v185 = vld [vmem:[%s168 + $0x3c] sm:$0xf]
        %v186 = vld [vmem:[%s168 + $0x40] sm:$0xf]
        %v187 = vld [vmem:[%s168 + $0x44] sm:$0xf]
        %v188 = vld [vmem:[%s168 + $0x48] sm:$0xf]
        %v189 = vld [vmem:[%s168 + $0x4c] sm:$0xf]
        %v190 = vld [vmem:[%s168 + $0x50] sm:$0xf]
        %v191 = vld [vmem:[%s168 + $0x54] sm:$0xf]
        %v192 = vld [vmem:[%s168 + $0x58] sm:$0xf]
        %v193 = vld [vmem:[%s168 + $0x5c] sm:$0xf]
        %v194 = vld [vmem:[%s168 + $0x60] sm:$0xf]
        %v195 = vld [vmem:[%s168 + $0x64] sm:$0xf]
        %v196 = vld [vmem:[%s168 + $0x68] sm:$0xf]
        %v197 = vld [vmem:[%s168 + $0x6c] sm:$0xf]
        %v198 = vld [vmem:[%s168 + $0x70] sm:$0xf]
        %v199 = vld [vmem:[%s168 + $0x74] sm:$0xf]
        %v200 = vld [vmem:[%s168 + $0x78] sm:$0xf]
        %v201 = vld [vmem:[%s168 + $0x7c] sm:$0xf]
        %v202 = vld [vmem:[%s168 + $0x80] sm:$0xf]
        %v203 = vld [vmem:[%s2] sm:$0x3f]
        %v204 = vld [vmem:[%s1] sm:$0xf]
        %v205 = vld [vmem:[%s1 + $0x4] sm:$0xf]
        %v206 = vld [vmem:[%s1 + $0x8] sm:$0xf]
        %v207 = vld [vmem:[%s1 + $0xc] sm:$0xf]
        %v208 = vld [vmem:[%s1 + $0x10] sm:$0xf]
        %v209 = vld [vmem:[%s1 + $0x14] sm:$0xf]
        %v210 = vld [vmem:[%s1 + $0x18] sm:$0xf]
        %v211 = vld [vmem:[%s1 + $0x1c] sm:$0xf]
        %v212 = vld [vmem:[%s1 + $0x20] sm:$0xf]
        %v213 = vld [vmem:[%s1 + $0x24] sm:$0xf]
        %v214 = vld [vmem:[%s1 + $0x28] sm:$0xf]
        %v215 = vld [vmem:[%s1 + $0x2c] sm:$0xf]
        %v216 = vld [vmem:[%s1 + $0x30] sm:$0xf]
        %v217 = vld [vmem:[%s1 + $0x34] sm:$0xf]
        %v218 = vld [vmem:[%s1 + $0x38] sm:$0xf]
        %v219 = vld [vmem:[%s1 + $0x3c] sm:$0xf]
        %v220 = vlaneseq
        %v221 = vshrl.u32 %v220, 7
        %v222 = vsub.s32 0, %v221
        %v223 = vrot.slane %v203, %v222
        %v240 = vunpack.c.l.b16 %v186
        %v241 = vunpack.c.l.b16 %v187
        %v242 = vunpack.c.l.b16 %v188
        %v243 = vunpack.c.l.b16 %v189
        %v244 = vunpack.c.l.b16 %v190
        %v245 = vunpack.c.l.b16 %v191
        %v246 = vunpack.c.l.b16 %v192
        %v247 = vunpack.c.l.b16 %v193
        %v248 = vunpack.c.l.b16 %v194
        %v249 = vunpack.c.l.b16 %v195
        %v250 = vunpack.c.l.b16 %v196
        %v251 = vunpack.c.l.b16 %v197
        %v252 = vunpack.c.l.b16 %v198
        %v253 = vunpack.c.l.b16 %v199
        %v254 = vunpack.c.l.b16 %v200
        %v255 = vunpack.c.l.b16 %v201
        %v256 = vpack.c.b16 %v241, %v240
        %v257 = vpack.c.b16 %v243, %v242
        %v258 = vpack.c.b16 %v245, %v244
        %v259 = vpack.c.b16 %v247, %v246
        %v260 = vpack.c.b16 %v249, %v248
        %v261 = vpack.c.b16 %v251, %v250
        %v262 = vpack.c.b16 %v253, %v252
        %v263 = vpack.c.b16 %v255, %v254
        %v288 = vunpack.c.l.b16 %v204
        %v289 = vunpack.c.l.b16 %v205
        %v290 = vunpack.c.l.b16 %v206
        %v291 = vunpack.c.l.b16 %v207
        %v292 = vunpack.c.l.b16 %v208
        %v293 = vunpack.c.l.b16 %v209
        %v294 = vunpack.c.l.b16 %v210
        %v295 = vunpack.c.l.b16 %v211
        %v296 = vunpack.c.l.b16 %v212
        %v297 = vunpack.c.l.b16 %v213
        %v298 = vunpack.c.l.b16 %v214
        %v299 = vunpack.c.l.b16 %v215
        %v300 = vunpack.c.l.b16 %v216
        %v301 = vunpack.c.l.b16 %v217
        %v302 = vunpack.c.l.b16 %v218
        %v303 = vunpack.c.l.b16 %v219
        %v304 = vpack.c.b16 %v289, %v288
        %v305 = vpack.c.b16 %v291, %v290
        %v306 = vpack.c.b16 %v293, %v292
        %v307 = vpack.c.b16 %v295, %v294
        %v308 = vpack.c.b16 %v297, %v296
        %v309 = vpack.c.b16 %v299, %v298
        %v310 = vpack.c.b16 %v301, %v300
        %v311 = vpack.c.b16 %v303, %v302
        %320 = vmatprep.subr.bf16.mxu0 0
        %321 = vmatpush1.bf16.msra.mxu0 %v304
        %322 = vmatprep.subr.bf16.mxu0 0
        %323 = vmatpush1.bf16.msra.mxu0 %v305
        %324 = vmatprep.subr.bf16.mxu0 0
        %325 = vmatpush1.bf16.msra.mxu0 %v306
        %326 = vmatprep.subr.bf16.mxu0 0
        %327 = vmatpush1.bf16.msra.mxu0 %v307
        %328 = vmatprep.subr.bf16.mxu0 0
        %329 = vmatpush1.bf16.msra.mxu0 %v308
        %330 = vmatprep.subr.bf16.mxu0 0
        %331 = vmatpush1.bf16.msra.mxu0 %v309
        %332 = vmatprep.subr.bf16.mxu0 0
        %333 = vmatpush1.bf16.msra.mxu0 %v310
        %334 = vmatprep.subr.bf16.mxu0 0
        %335 = vmatpush1.bf16.msra.mxu0 %v311
        %336 = vmatprep.subr.bf16.mxu0 0
        %337 = vmatpush1.bf16.msra.mxu0 0
        %338 = vmatprep.subr.bf16.mxu0 0
        %339 = vmatpush1.bf16.msra.mxu0 0
        %340 = vmatprep.subr.bf16.mxu0 0
        %341 = vmatpush1.bf16.msra.mxu0 0
        %342 = vmatprep.subr.bf16.mxu0 0
        %343 = vmatpush1.bf16.msra.mxu0 0
        %344 = vmatprep.subr.bf16.mxu0 0
        %345 = vmatpush1.bf16.msra.mxu0 0
        %346 = vmatprep.subr.bf16.mxu0 0
        %347 = vmatpush1.bf16.msra.mxu0 0
        %348 = vmatprep.subr.bf16.mxu0 0
        %349 = vmatpush1.bf16.msra.mxu0 0
        %350 = vmatprep.subr.bf16.mxu0 0
        %351 = vmatpush1.bf16.msra.mxu0 0
        %352 = vmatprep.mubr.bf16.mxu0 0
        %353 = vmatmul.mubr.bf16.gmra.mrb[0].mxu0 %v256
        %v354 = vpop.f32.mrb[0].mxu0
        %v355 = vadd.f32 %v223, %v354
        %v356 = vpop.f32.mrb[0].mxu0
        %v357 = vpop.f32.mrb[0].mxu0
        %v358 = vadd.f32 %v223, %v357
        %v359 = vpop.f32.mrb[0].mxu0
        %360 = vmatprep.mubr.bf16.mxu0 0
        %361 = vmatmul.mubr.bf16.gmra.mrb[0].mxu0 %v257
        %v362 = vpop.f32.mrb[0].mxu0
        %v363 = vadd.f32 %v223, %v362
        %v364 = vpop.f32.mrb[0].mxu0
        %v365 = vpop.f32.mrb[0].mxu0
        %v366 = vadd.f32 %v223, %v365
        %v367 = vpop.f32.mrb[0].mxu0
        %368 = vmatprep.mubr.bf16.mxu0 0
        %369 = vmatmul.mubr.bf16.gmra.mrb[0].mxu0 %v258
        %v370 = vpop.f32.mrb[0].mxu0
        %v371 = vadd.f32 %v223, %v370
        %v372 = vpop.f32.mrb[0].mxu0
        %v373 = vpop.f32.mrb[0].mxu0
        %v374 = vadd.f32 %v223, %v373
        %v375 = vpop.f32.mrb[0].mxu0
        %376 = vmatprep.mubr.bf16.mxu0 0
        %377 = vmatmul.mubr.bf16.gmra.mrb[0].mxu0 %v259
        %v378 = vpop.f32.mrb[0].mxu0
        %v379 = vadd.f32 %v223, %v378
        %v380 = vpop.f32.mrb[0].mxu0
        %v381 = vpop.f32.mrb[0].mxu0
        %v382 = vadd.f32 %v223, %v381
        %v383 = vpop.f32.mrb[0].mxu0
        %384 = vmatprep.mubr.bf16.mxu0 0
        %385 = vmatmul.mubr.bf16.gmra.mrb[0].mxu0 %v260
        %v386 = vpop.f32.mrb[0].mxu0
        %v387 = vadd.f32 %v223, %v386
        %v388 = vpop.f32.mrb[0].mxu0
        %v389 = vpop.f32.mrb[0].mxu0
        %v390 = vadd.f32 %v223, %v389
        %v391 = vpop.f32.mrb[0].mxu0
        %392 = vmatprep.mubr.bf16.mxu0 0
        %393 = vmatmul.mubr.bf16.gmra.mrb[0].mxu0 %v261
        %v394 = vpop.f32.mrb[0].mxu0
        %v395 = vadd.f32 %v223, %v394
        %v396 = vpop.f32.mrb[0].mxu0
        %v397 = vpop.f32.mrb[0].mxu0
        %v398 = vadd.f32 %v223, %v397
        %v399 = vpop.f32.mrb[0].mxu0
        %400 = vmatprep.mubr.bf16.mxu0 0
        %401 = vmatmul.mubr.bf16.gmra.mrb[0].mxu0 %v262
        %v402 = vpop.f32.mrb[0].mxu0
        %v403 = vadd.f32 %v223, %v402
        %v404 = vpop.f32.mrb[0].mxu0
        %v405 = vpop.f32.mrb[0].mxu0
        %v406 = vadd.f32 %v223, %v405
        %v407 = vpop.f32.mrb[0].mxu0
        %408 = vmatprep.mubr.bf16.mxu0 0
        %409 = vmatmul.mubr.bf16.gmra.mrb[0].mxu0 %v263
        %v410 = vpop.f32.mrb[0].mxu0
        %v411 = vadd.f32 %v223, %v410
        %v412 = vpop.f32.mrb[0].mxu0
        %v413 = vpop.f32.mrb[0].mxu0
        %v414 = vadd.f32 %v223, %v413
        %v415 = vpop.f32.mrb[0].mxu0
        %416 = vdwg.mxu0
        %v417 = vpack.c.bf16 %v358, %v355
        %v418 = vpack.c.bf16 %v366, %v363
        %v419 = vpack.c.bf16 %v374, %v371
        %v420 = vpack.c.bf16 %v382, %v379
        %v421 = vpack.c.bf16 %v390, %v387
        %v422 = vpack.c.bf16 %v398, %v395
        %v423 = vpack.c.bf16 %v406, %v403
        %v424 = vpack.c.bf16 %v414, %v411
        %v425 = vld [vmem:[%s1 + $0x40] sm:$0xf]
        %v426 = vld [vmem:[%s1 + $0x44] sm:$0xf]
        %v427 = vld [vmem:[%s1 + $0x48] sm:$0xf]
        %v428 = vld [vmem:[%s1 + $0x4c] sm:$0xf]
        %v433 = vunpack.c.l.b16 %v425
        %v434 = vunpack.c.l.b16 %v426
        %v435 = vunpack.c.l.b16 %v427
        %v436 = vunpack.c.l.b16 %v428
        %v437 = vpack.c.b16 %v434, %v433
        %v438 = vpack.c.b16 %v436, %v435
        %vm441 = vcmask 261120
        %v443 = vsel %vm441, %v417, 0
        %v446 = vsel %vm441, %v418, 0
        %v449 = vsel %vm441, %v419, 0
        %v452 = vsel %vm441, %v420, 0
        %v455 = vsel %vm441, %v421, 0
        %v458 = vsel %vm441, %v422, 0
        %v461 = vsel %vm441, %v423, 0
        %v464 = vsel %vm441, %v424, 0
        %466 = vmatprep.subr.bf16.mxu0 0
        %467 = vmatpush1.bf16.msra.mxu0 %v437
        %468 = vmatprep.subr.bf16.mxu0 0
        %469 = vmatpush1.bf16.msra.mxu0 %v438
        %470 = vmatprep.subr.bf16.mxu0 0
        %471 = vmatpush1.bf16.msra.mxu0 0
        %472 = vmatprep.subr.bf16.mxu0 0
        %473 = vmatpush1.bf16.msra.mxu0 0
        %474 = vmatprep.subr.bf16.mxu0 0
        %475 = vmatpush1.bf16.msra.mxu0 0
        %476 = vmatprep.subr.bf16.mxu0 0
        %477 = vmatpush1.bf16.msra.mxu0 0
        %478 = vmatprep.subr.bf16.mxu0 0
        %479 = vmatpush1.bf16.msra.mxu0 0
        %480 = vmatprep.subr.bf16.mxu0 0
        %481 = vmatpush1.bf16.msra.mxu0 0
        %482 = vmatprep.subr.bf16.mxu0 0
        %483 = vmatpush1.bf16.msra.mxu0 0
        %484 = vmatprep.subr.bf16.mxu0 0
        %485 = vmatpush1.bf16.msra.mxu0 0
        %486 = vmatprep.subr.bf16.mxu0 0
        %487 = vmatpush1.bf16.msra.mxu0 0
        %488 = vmatprep.subr.bf16.mxu0 0
        %489 = vmatpush1.bf16.msra.mxu0 0
        %490 = vmatprep.subr.bf16.mxu0 0
        %491 = vmatpush1.bf16.msra.mxu0 0
        %492 = vmatprep.subr.bf16.mxu0 0
        %493 = vmatpush1.bf16.msra.mxu0 0
        %494 = vmatprep.subr.bf16.mxu0 0
        %495 = vmatpush1.bf16.msra.mxu0 0
        %496 = vmatprep.subr.bf16.mxu0 0
        %497 = vmatpush1.bf16.msra.mxu0 0
        %498 = vmatprep.mubr.bf16.mxu0 0
        %499 = vmatmul.mubr.bf16.gmra.mrb[0].mxu0 %v443
        %v500 = vpop.f32.mrb[0].mxu0
        %v501 = vadd.f32 0.0, %v500
        %v502 = vpop.f32.mrb[0].mxu0
        %v503 = vpop.f32.mrb[0].mxu0
        %v504 = vadd.f32 0.0, %v503
        %v505 = vpop.f32.mrb[0].mxu0
        %506 = vmatprep.mubr.bf16.mxu0 0
        %507 = vmatmul.mubr.bf16.gmra.mrb[0].mxu0 %v446
        %v508 = vpop.f32.mrb[0].mxu0
        %v509 = vadd.f32 0.0, %v508
        %v510 = vpop.f32.mrb[0].mxu0
        %v511 = vpop.f32.mrb[0].mxu0
        %v512 = vadd.f32 0.0, %v511
        %v513 = vpop.f32.mrb[0].mxu0
        %514 = vmatprep.mubr.bf16.mxu0 0
        %515 = vmatmul.mubr.bf16.gmra.mrb[0].mxu0 %v449
        %v516 = vpop.f32.mrb[0].mxu0
        %v517 = vadd.f32 0.0, %v516
        %v518 = vpop.f32.mrb[0].mxu0
        %v519 = vpop.f32.mrb[0].mxu0
        %v520 = vadd.f32 0.0, %v519
        %v521 = vpop.f32.mrb[0].mxu0
        %522 = vmatprep.mubr.bf16.mxu0 0
        %523 = vmatmul.mubr.bf16.gmra.mrb[0].mxu0 %v452
        %v524 = vpop.f32.mrb[0].mxu0
        %v525 = vadd.f32 0.0, %v524
        %v526 = vpop.f32.mrb[0].mxu0
        %v527 = vpop.f32.mrb[0].mxu0
        %v528 = vadd.f32 0.0, %v527
        %v529 = vpop.f32.mrb[0].mxu0
        %530 = vmatprep.mubr.bf16.mxu0 0
        %531 = vmatmul.mubr.bf16.gmra.mrb[0].mxu0 %v455
        %v532 = vpop.f32.mrb[0].mxu0
        %v533 = vadd.f32 0.0, %v532
        %v534 = vpop.f32.mrb[0].mxu0
        %v535 = vpop.f32.mrb[0].mxu0
        %v536 = vadd.f32 0.0, %v535
        %v537 = vpop.f32.mrb[0].mxu0
        %538 = vmatprep.mubr.bf16.mxu0 0
        %539 = vmatmul.mubr.bf16.gmra.mrb[0].mxu0 %v458
        %v540 = vpop.f32.mrb[0].mxu0
        %v541 = vadd.f32 0.0, %v540
        %v542 = vpop.f32.mrb[0].mxu0
        %v543 = vpop.f32.mrb[0].mxu0
        %v544 = vadd.f32 0.0, %v543
        %v545 = vpop.f32.mrb[0].mxu0
        %546 = vmatprep.mubr.bf16.mxu0 0
        %547 = vmatmul.mubr.bf16.gmra.mrb[0].mxu0 %v461
        %v548 = vpop.f32.mrb[0].mxu0
        %v549 = vadd.f32 0.0, %v548
        %v550 = vpop.f32.mrb[0].mxu0
        %v551 = vpop.f32.mrb[0].mxu0
        %v552 = vadd.f32 0.0, %v551
        %v553 = vpop.f32.mrb[0].mxu0
        %554 = vmatprep.mubr.bf16.mxu0 0
        %555 = vmatmul.mubr.bf16.gmra.mrb[0].mxu0 %v464
        %v556 = vpop.f32.mrb[0].mxu0
        %v557 = vadd.f32 0.0, %v556
        %v558 = vpop.f32.mrb[0].mxu0
        %v559 = vpop.f32.mrb[0].mxu0
        %v560 = vadd.f32 0.0, %v559
        %v561 = vpop.f32.mrb[0].mxu0
        %562 = vdwg.mxu0
        %v563 = vpack.c.bf16 %v504, %v501
        %v564 = vpack.c.bf16 %v512, %v509
        %v565 = vpack.c.bf16 %v520, %v517
        %v566 = vpack.c.bf16 %v528, %v525
        %v567 = vpack.c.bf16 %v536, %v533
        %v568 = vpack.c.bf16 %v544, %v541
        %v569 = vpack.c.bf16 %v552, %v549
        %v570 = vpack.c.bf16 %v560, %v557
        %v571 = vlaneseq
        %v572 = vshrl.u32 %v571, 7
        %v573 = vsub.s32 1, %v572
        %v574 = vrot.slane %v203, %v573
        %v591 = vunpack.c.l.b16 %v170
        %v592 = vunpack.c.l.b16 %v171
        %v593 = vunpack.c.l.b16 %v172
        %v594 = vunpack.c.l.b16 %v173
        %v595 = vunpack.c.l.b16 %v174
        %v596 = vunpack.c.l.b16 %v175
        %v597 = vunpack.c.l.b16 %v176
        %v598 = vunpack.c.l.b16 %v177
        %v599 = vunpack.c.l.b16 %v178
        %v600 = vunpack.c.l.b16 %v179
        %v601 = vunpack.c.l.b16 %v180
        %v602 = vunpack.c.l.b16 %v181
        %v603 = vunpack.c.l.b16 %v182
        %v604 = vunpack.c.l.b16 %v183
        %v605 = vunpack.c.l.b16 %v184
        %v606 = vunpack.c.l.b16 %v185
        %v607 = vpack.c.b16 %v592, %v591
        %v608 = vpack.c.b16 %v594, %v593
        %v609 = vpack.c.b16 %v596, %v595
        %v610 = vpack.c.b16 %v598, %v597
        %v611 = vpack.c.b16 %v600, %v599
        %v612 = vpack.c.b16 %v602, %v601
        %v613 = vpack.c.b16 %v604, %v603
        %v614 = vpack.c.b16 %v606, %v605
        %623 = vmatprep.subr.bf16.mxu0 0
        %624 = vmatpush1.bf16.msra.mxu0 %v563
        %625 = vmatprep.subr.bf16.mxu0 0
        %626 = vmatpush1.bf16.msra.mxu0 %v564
        %627 = vmatprep.subr.bf16.mxu0 0
        %628 = vmatpush1.bf16.msra.mxu0 %v565
        %629 = vmatprep.subr.bf16.mxu0 0
        %630 = vmatpush1.bf16.msra.mxu0 %v566
        %631 = vmatprep.subr.bf16.mxu0 0
        %632 = vmatpush1.bf16.msra.mxu0 %v567
        %633 = vmatprep.subr.bf16.mxu0 0
        %634 = vmatpush1.bf16.msra.mxu0 %v568
        %635 = vmatprep.subr.bf16.mxu0 0
        %636 = vmatpush1.bf16.msra.mxu0 %v569
        %637 = vmatprep.subr.bf16.mxu0 0
        %638 = vmatpush1.bf16.msra.mxu0 %v570
        %639 = vmatprep.subr.bf16.mxu0 0
        %640 = vmatpush1.bf16.msra.mxu0 0
        %641 = vmatprep.subr.bf16.mxu0 0
        %642 = vmatpush1.bf16.msra.mxu0 0
        %643 = vmatprep.subr.bf16.mxu0 0
        %644 = vmatpush1.bf16.msra.mxu0 0
        %645 = vmatprep.subr.bf16.mxu0 0
        %646 = vmatpush1.bf16.msra.mxu0 0
        %647 = vmatprep.subr.bf16.mxu0 0
        %648 = vmatpush1.bf16.msra.mxu0 0
        %649 = vmatprep.subr.bf16.mxu0 0
        %650 = vmatpush1.bf16.msra.mxu0 0
        %651 = vmatprep.subr.bf16.mxu0 0
        %652 = vmatpush1.bf16.msra.mxu0 0
        %653 = vmatprep.subr.bf16.mxu0 0
        %654 = vmatpush1.bf16.msra.mxu0 0
        %655 = vmatprep.mubr.bf16.mxu0 0
        %656 = vmatmul.mubr.bf16.gmra.mrb[0].mxu0 %v607
        %v657 = vpop.f32.mrb[0].mxu0
        %v658 = vadd.f32 %v574, %v657
        %v659 = vpop.f32.mrb[0].mxu0
        %v660 = vpop.f32.mrb[0].mxu0
        %v661 = vadd.f32 %v574, %v660
        %v662 = vpop.f32.mrb[0].mxu0
        %663 = vmatprep.mubr.bf16.mxu0 0
        %664 = vmatmul.mubr.bf16.gmra.mrb[0].mxu0 %v608
        %v665 = vpop.f32.mrb[0].mxu0
        %v666 = vadd.f32 %v574, %v665
        %v667 = vpop.f32.mrb[0].mxu0
        %v668 = vpop.f32.mrb[0].mxu0
        %v669 = vadd.f32 %v574, %v668
        %v670 = vpop.f32.mrb[0].mxu0
        %671 = vmatprep.mubr.bf16.mxu0 0
        %672 = vmatmul.mubr.bf16.gmra.mrb[0].mxu0 %v609
        %v673 = vpop.f32.mrb[0].mxu0
        %v674 = vadd.f32 %v574, %v673
        %v675 = vpop.f32.mrb[0].mxu0
        %v676 = vpop.f32.mrb[0].mxu0
        %v677 = vadd.f32 %v574, %v676
        %v678 = vpop.f32.mrb[0].mxu0
        %679 = vmatprep.mubr.bf16.mxu0 0
        %680 = vmatmul.mubr.bf16.gmra.mrb[0].mxu0 %v610
        %v681 = vpop.f32.mrb[0].mxu0
        %v682 = vadd.f32 %v574, %v681
        %v683 = vpop.f32.mrb[0].mxu0
        %v684 = vpop.f32.mrb[0].mxu0
        %v685 = vadd.f32 %v574, %v684
        %v686 = vpop.f32.mrb[0].mxu0
        %687 = vmatprep.mubr.bf16.mxu0 0
        %688 = vmatmul.mubr.bf16.gmra.mrb[0].mxu0 %v611
        %v689 = vpop.f32.mrb[0].mxu0
        %v690 = vadd.f32 %v574, %v689
        %v691 = vpop.f32.mrb[0].mxu0
        %v692 = vpop.f32.mrb[0].mxu0
        %v693 = vadd.f32 %v574, %v692
        %v694 = vpop.f32.mrb[0].mxu0
        %695 = vmatprep.mubr.bf16.mxu0 0
        %696 = vmatmul.mubr.bf16.gmra.mrb[0].mxu0 %v612
        %v697 = vpop.f32.mrb[0].mxu0
        %v698 = vadd.f32 %v574, %v697
        %v699 = vpop.f32.mrb[0].mxu0
        %v700 = vpop.f32.mrb[0].mxu0
        %v701 = vadd.f32 %v574, %v700
        %v702 = vpop.f32.mrb[0].mxu0
        %703 = vmatprep.mubr.bf16.mxu0 0
        %704 = vmatmul.mubr.bf16.gmra.mrb[0].mxu0 %v613
        %v705 = vpop.f32.mrb[0].mxu0
        %v706 = vadd.f32 %v574, %v705
        %v707 = vpop.f32.mrb[0].mxu0
        %v708 = vpop.f32.mrb[0].mxu0
        %v709 = vadd.f32 %v574, %v708
        %v710 = vpop.f32.mrb[0].mxu0
        %711 = vmatprep.mubr.bf16.mxu0 0
        %712 = vmatmul.mubr.bf16.gmra.mrb[0].mxu0 %v614
        %v713 = vpop.f32.mrb[0].mxu0
        %v714 = vadd.f32 %v574, %v713
        %v715 = vpop.f32.mrb[0].mxu0
        %v716 = vpop.f32.mrb[0].mxu0
        %v717 = vadd.f32 %v574, %v716
        %v718 = vpop.f32.mrb[0].mxu0
        %719 = vdwg.mxu0
        %v720 = vmax.f32 %v658, 0.0
        %v721 = vmax.f32 %v661, 0.0
        %v722 = vmax.f32 %v666, 0.0
        %v723 = vmax.f32 %v669, 0.0
        %v724 = vmax.f32 %v674, 0.0
        %v725 = vmax.f32 %v677, 0.0
        %v726 = vmax.f32 %v682, 0.0
        %v727 = vmax.f32 %v685, 0.0
        %v728 = vmax.f32 %v690, 0.0
        %v729 = vmax.f32 %v693, 0.0
        %v730 = vmax.f32 %v698, 0.0
        %v731 = vmax.f32 %v701, 0.0
        %v732 = vmax.f32 %v706, 0.0
        %v733 = vmax.f32 %v709, 0.0
        %v734 = vmax.f32 %v714, 0.0
        %v735 = vmax.f32 %v717, 0.0
        %v736 = vpack.c.bf16 %v721, %v720
        %v737 = vpack.c.bf16 %v723, %v722
        %v738 = vpack.c.bf16 %v725, %v724
        %v739 = vpack.c.bf16 %v727, %v726
        %v740 = vpack.c.bf16 %v729, %v728
        %v741 = vpack.c.bf16 %v731, %v730
        %v742 = vpack.c.bf16 %v733, %v732
        %v743 = vpack.c.bf16 %v735, %v734
        %752 = vrot.lane.b32.xlu0 %v736, 32
        %v753 = vpop.permute.xlu0 %752
        %754 = vrot.lane.b32.xlu0 %v737, 32
        %v755 = vpop.permute.xlu0 %754
        %756 = vrot.lane.b32.xlu0 %v738, 32
        %v757 = vpop.permute.xlu0 %756
        %758 = vrot.lane.b32.xlu0 %v739, 32
        %v759 = vpop.permute.xlu0 %758
        %760 = vrot.lane.b32.xlu0 %v740, 32
        %v761 = vpop.permute.xlu0 %760
        %762 = vrot.lane.b32.xlu0 %v741, 32
        %v763 = vpop.permute.xlu0 %762
        %764 = vrot.lane.b32.xlu0 %v742, 32
        %v765 = vpop.permute.xlu0 %764
        %766 = vrot.lane.b32.xlu0 %v743, 32
        %v767 = vpop.permute.xlu0 %766
        %v769 = vsel %vm441, %v417, %v753
        %v771 = vsel %vm441, %v418, %v755
        %v773 = vsel %vm441, %v419, %v757
        %v775 = vsel %vm441, %v420, %v759
        %v777 = vsel %vm441, %v421, %v761
        %v779 = vsel %vm441, %v422, %v763
        %v781 = vsel %vm441, %v423, %v765
        %v783 = vsel %vm441, %v424, %v767
        %v784 = vld [vmem:[%s1 + $0x50] sm:$0xf]
        %v785 = vld [vmem:[%s1 + $0x54] sm:$0xf]
        %v786 = vld [vmem:[%s1 + $0x58] sm:$0xf]
        %v787 = vld [vmem:[%s1 + $0x5c] sm:$0xf]
        %v788 = vld [vmem:[%s1 + $0x60] sm:$0xf]
        %v789 = vld [vmem:[%s1 + $0x64] sm:$0xf]
        %v790 = vld [vmem:[%s1 + $0x68] sm:$0xf]
        %v791 = vld [vmem:[%s1 + $0x6c] sm:$0xf]
        %v800 = vunpack.c.l.b16 %v784
        %v801 = vunpack.c.l.b16 %v785
        %v802 = vunpack.c.l.b16 %v786
        %v803 = vunpack.c.l.b16 %v787
        %v804 = vunpack.c.l.b16 %v788
        %v805 = vunpack.c.l.b16 %v789
        %v806 = vunpack.c.l.b16 %v790
        %v807 = vunpack.c.l.b16 %v791
        %v808 = vpack.c.b16 %v801, %v800
        %v809 = vpack.c.b16 %v803, %v802
        %v810 = vpack.c.b16 %v805, %v804
        %v811 = vpack.c.b16 %v807, %v806
        %vm816 = vcmask 523264
        %v817 = vsel %vm816, %v769, 0
        %v819 = vsel %vm816, %v771, 0
        %v821 = vsel %vm816, %v773, 0
        %v823 = vsel %vm816, %v775, 0
        %v825 = vsel %vm816, %v777, 0
        %v827 = vsel %vm816, %v779, 0
        %v829 = vsel %vm816, %v781, 0
        %v831 = vsel %vm816, %v783, 0
        %833 = vmatprep.subr.bf16.mxu0 0
        %834 = vmatpush1.bf16.msra.mxu0 %v808
        %835 = vmatprep.subr.bf16.mxu0 0
        %836 = vmatpush1.bf16.msra.mxu0 %v809
        %837 = vmatprep.subr.bf16.mxu0 0
        %838 = vmatpush1.bf16.msra.mxu0 %v810
        %839 = vmatprep.subr.bf16.mxu0 0
        %840 = vmatpush1.bf16.msra.mxu0 %v811
        %841 = vmatprep.subr.bf16.mxu0 0
        %842 = vmatpush1.bf16.msra.mxu0 0
        %843 = vmatprep.subr.bf16.mxu0 0
        %844 = vmatpush1.bf16.msra.mxu0 0
        %845 = vmatprep.subr.bf16.mxu0 0
        %846 = vmatpush1.bf16.msra.mxu0 0
        %847 = vmatprep.subr.bf16.mxu0 0
        %848 = vmatpush1.bf16.msra.mxu0 0
        %849 = vmatprep.subr.bf16.mxu0 0
        %850 = vmatpush1.bf16.msra.mxu0 0
        %851 = vmatprep.subr.bf16.mxu0 0
        %852 = vmatpush1.bf16.msra.mxu0 0
        %853 = vmatprep.subr.bf16.mxu0 0
        %854 = vmatpush1.bf16.msra.mxu0 0
        %855 = vmatprep.subr.bf16.mxu0 0
        %856 = vmatpush1.bf16.msra.mxu0 0
        %857 = vmatprep.subr.bf16.mxu0 0
        %858 = vmatpush1.bf16.msra.mxu0 0
        %859 = vmatprep.subr.bf16.mxu0 0
        %860 = vmatpush1.bf16.msra.mxu0 0
        %861 = vmatprep.subr.bf16.mxu0 0
        %862 = vmatpush1.bf16.msra.mxu0 0
        %863 = vmatprep.subr.bf16.mxu0 0
        %864 = vmatpush1.bf16.msra.mxu0 0
        %865 = vmatprep.mubr.bf16.mxu0 0
        %866 = vmatmul.mubr.bf16.gmra.mrb[0].mxu0 %v817
        %v867 = vpop.f32.mrb[0].mxu0
        %v868 = vadd.f32 0.0, %v867
        %v869 = vpop.f32.mrb[0].mxu0
        %v870 = vpop.f32.mrb[0].mxu0
        %v871 = vadd.f32 0.0, %v870
        %v872 = vpop.f32.mrb[0].mxu0
        %873 = vmatprep.mubr.bf16.mxu0 0
        %874 = vmatmul.mubr.bf16.gmra.mrb[0].mxu0 %v819
        %v875 = vpop.f32.mrb[0].mxu0
        %v876 = vadd.f32 0.0, %v875
        %v877 = vpop.f32.mrb[0].mxu0
        %v878 = vpop.f32.mrb[0].mxu0
        %v879 = vadd.f32 0.0, %v878
        %v880 = vpop.f32.mrb[0].mxu0
        %881 = vmatprep.mubr.bf16.mxu0 0
        %882 = vmatmul.mubr.bf16.gmra.mrb[0].mxu0 %v821
        %v883 = vpop.f32.mrb[0].mxu0
        %v884 = vadd.f32 0.0, %v883
        %v885 = vpop.f32.mrb[0].mxu0
        %v886 = vpop.f32.mrb[0].mxu0
        %v887 = vadd.f32 0.0, %v886
        %v888 = vpop.f32.mrb[0].mxu0
        %889 = vmatprep.mubr.bf16.mxu0 0
        %890 = vmatmul.mubr.bf16.gmra.mrb[0].mxu0 %v823
        %v891 = vpop.f32.mrb[0].mxu0
        %v892 = vadd.f32 0.0, %v891
        %v893 = vpop.f32.mrb[0].mxu0
        %v894 = vpop.f32.mrb[0].mxu0
        %v895 = vadd.f32 0.0, %v894
        %v896 = vpop.f32.mrb[0].mxu0
        %897 = vmatprep.mubr.bf16.mxu0 0
        %898 = vmatmul.mubr.bf16.gmra.mrb[0].mxu0 %v825
        %v899 = vpop.f32.mrb[0].mxu0
        %v900 = vadd.f32 0.0, %v899
        %v901 = vpop.f32.mrb[0].mxu0
        %v902 = vpop.f32.mrb[0].mxu0
        %v903 = vadd.f32 0.0, %v902
        %v904 = vpop.f32.mrb[0].mxu0
        %905 = vmatprep.mubr.bf16.mxu0 0
        %906 = vmatmul.mubr.bf16.gmra.mrb[0].mxu0 %v827
        %v907 = vpop.f32.mrb[0].mxu0
        %v908 = vadd.f32 0.0, %v907
        %v909 = vpop.f32.mrb[0].mxu0
        %v910 = vpop.f32.mrb[0].mxu0
        %v911 = vadd.f32 0.0, %v910
        %v912 = vpop.f32.mrb[0].mxu0
        %913 = vmatprep.mubr.bf16.mxu0 0
        %914 = vmatmul.mubr.bf16.gmra.mrb[0].mxu0 %v829
        %v915 = vpop.f32.mrb[0].mxu0
        %v916 = vadd.f32 0.0, %v915
        %v917 = vpop.f32.mrb[0].mxu0
        %v918 = vpop.f32.mrb[0].mxu0
        %v919 = vadd.f32 0.0, %v918
        %v920 = vpop.f32.mrb[0].mxu0
        %921 = vmatprep.mubr.bf16.mxu0 0
        %922 = vmatmul.mubr.bf16.gmra.mrb[0].mxu0 %v831
        %v923 = vpop.f32.mrb[0].mxu0
        %v924 = vadd.f32 0.0, %v923
        %v925 = vpop.f32.mrb[0].mxu0
        %v926 = vpop.f32.mrb[0].mxu0
        %v927 = vadd.f32 0.0, %v926
        %v928 = vpop.f32.mrb[0].mxu0
        %929 = vdwg.mxu0
        %v930 = vpack.c.bf16 %v871, %v868
        %v931 = vpack.c.bf16 %v879, %v876
        %v932 = vpack.c.bf16 %v887, %v884
        %v933 = vpack.c.bf16 %v895, %v892
        %v934 = vpack.c.bf16 %v903, %v900
        %v935 = vpack.c.bf16 %v911, %v908
        %v936 = vpack.c.bf16 %v919, %v916
        %v937 = vpack.c.bf16 %v927, %v924
        %v938 = vlaneseq
        %v939 = vshrl.u32 %v938, 7
        %v940 = vsub.s32 2, %v939
        %v941 = vrot.slane %v203, %v940
        %942 = vmatprep.subr.bf16.mxu0 0
        %943 = vmatpush1.bf16.msra.mxu0 %v930
        %944 = vmatprep.subr.bf16.mxu0 0
        %945 = vmatpush1.bf16.msra.mxu0 %v931
        %946 = vmatprep.subr.bf16.mxu0 0
        %947 = vmatpush1.bf16.msra.mxu0 %v932
        %948 = vmatprep.subr.bf16.mxu0 0
        %949 = vmatpush1.bf16.msra.mxu0 %v933
        %950 = vmatprep.subr.bf16.mxu0 0
        %951 = vmatpush1.bf16.msra.mxu0 %v934
        %952 = vmatprep.subr.bf16.mxu0 0
        %953 = vmatpush1.bf16.msra.mxu0 %v935
        %954 = vmatprep.subr.bf16.mxu0 0
        %955 = vmatpush1.bf16.msra.mxu0 %v936
        %956 = vmatprep.subr.bf16.mxu0 0
        %957 = vmatpush1.bf16.msra.mxu0 %v937
        %958 = vmatprep.subr.bf16.mxu0 0
        %959 = vmatpush1.bf16.msra.mxu0 0
        %960 = vmatprep.subr.bf16.mxu0 0
        %961 = vmatpush1.bf16.msra.mxu0 0
        %962 = vmatprep.subr.bf16.mxu0 0
        %963 = vmatpush1.bf16.msra.mxu0 0
        %964 = vmatprep.subr.bf16.mxu0 0
        %965 = vmatpush1.bf16.msra.mxu0 0
        %966 = vmatprep.subr.bf16.mxu0 0
        %967 = vmatpush1.bf16.msra.mxu0 0
        %968 = vmatprep.subr.bf16.mxu0 0
        %969 = vmatpush1.bf16.msra.mxu0 0
        %970 = vmatprep.subr.bf16.mxu0 0
        %971 = vmatpush1.bf16.msra.mxu0 0
        %972 = vmatprep.subr.bf16.mxu0 0
        %973 = vmatpush1.bf16.msra.mxu0 0
        %974 = vmatprep.mubr.bf16.mxu0 0
        %975 = vmatmul.mubr.bf16.gmra.mrb[0].mxu0 %v607
        %v976 = vpop.f32.mrb[0].mxu0
        %v977 = vadd.f32 %v941, %v976
        %v978 = vpop.f32.mrb[0].mxu0
        %v979 = vpop.f32.mrb[0].mxu0
        %v980 = vadd.f32 %v941, %v979
        %v981 = vpop.f32.mrb[0].mxu0
        %982 = vmatprep.mubr.bf16.mxu0 0
        %983 = vmatmul.mubr.bf16.gmra.mrb[0].mxu0 %v608
        %v984 = vpop.f32.mrb[0].mxu0
        %v985 = vadd.f32 %v941, %v984
        %v986 = vpop.f32.mrb[0].mxu0
        %v987 = vpop.f32.mrb[0].mxu0
        %v988 = vadd.f32 %v941, %v987
        %v989 = vpop.f32.mrb[0].mxu0
        %990 = vmatprep.mubr.bf16.mxu0 0
        %991 = vmatmul.mubr.bf16.gmra.mrb[0].mxu0 %v609
        %v992 = vpop.f32.mrb[0].mxu0
        %v993 = vadd.f32 %v941, %v992
        %v994 = vpop.f32.mrb[0].mxu0
        %v995 = vpop.f32.mrb[0].mxu0
        %v996 = vadd.f32 %v941, %v995
        %v997 = vpop.f32.mrb[0].mxu0
        %998 = vmatprep.mubr.bf16.mxu0 0
        %999 = vmatmul.mubr.bf16.gmra.mrb[0].mxu0 %v610
        %v1000 = vpop.f32.mrb[0].mxu0
        %v1001 = vadd.f32 %v941, %v1000
        %v1002 = vpop.f32.mrb[0].mxu0
        %v1003 = vpop.f32.mrb[0].mxu0
        %v1004 = vadd.f32 %v941, %v1003
        %v1005 = vpop.f32.mrb[0].mxu0
        %1006 = vmatprep.mubr.bf16.mxu0 0
        %1007 = vmatmul.mubr.bf16.gmra.mrb[0].mxu0 %v611
        %v1008 = vpop.f32.mrb[0].mxu0
        %v1009 = vadd.f32 %v941, %v1008
        %v1010 = vpop.f32.mrb[0].mxu0
        %v1011 = vpop.f32.mrb[0].mxu0
        %v1012 = vadd.f32 %v941, %v1011
        %v1013 = vpop.f32.mrb[0].mxu0
        %1014 = vmatprep.mubr.bf16.mxu0 0
        %1015 = vmatmul.mubr.bf16.gmra.mrb[0].mxu0 %v612
        %v1016 = vpop.f32.mrb[0].mxu0
        %v1017 = vadd.f32 %v941, %v1016
        %v1018 = vpop.f32.mrb[0].mxu0
        %v1019 = vpop.f32.mrb[0].mxu0
        %v1020 = vadd.f32 %v941, %v1019
        %v1021 = vpop.f32.mrb[0].mxu0
        %1022 = vmatprep.mubr.bf16.mxu0 0
        %1023 = vmatmul.mubr.bf16.gmra.mrb[0].mxu0 %v613
        %v1024 = vpop.f32.mrb[0].mxu0
        %v1025 = vadd.f32 %v941, %v1024
        %v1026 = vpop.f32.mrb[0].mxu0
        %v1027 = vpop.f32.mrb[0].mxu0
        %v1028 = vadd.f32 %v941, %v1027
        %v1029 = vpop.f32.mrb[0].mxu0
        %1030 = vmatprep.mubr.bf16.mxu0 0
        %1031 = vmatmul.mubr.bf16.gmra.mrb[0].mxu0 %v614
        %v1032 = vpop.f32.mrb[0].mxu0
        %v1033 = vadd.f32 %v941, %v1032
        %v1034 = vpop.f32.mrb[0].mxu0
        %v1035 = vpop.f32.mrb[0].mxu0
        %v1036 = vadd.f32 %v941, %v1035
        %v1037 = vpop.f32.mrb[0].mxu0
        %1038 = vdwg.mxu0
        %v1039 = vmax.f32 %v977, 0.0
        %v1040 = vmax.f32 %v980, 0.0
        %v1041 = vmax.f32 %v985, 0.0
        %v1042 = vmax.f32 %v988, 0.0
        %v1043 = vmax.f32 %v993, 0.0
        %v1044 = vmax.f32 %v996, 0.0
        %v1045 = vmax.f32 %v1001, 0.0
        %v1046 = vmax.f32 %v1004, 0.0
        %v1047 = vmax.f32 %v1009, 0.0
        %v1048 = vmax.f32 %v1012, 0.0
        %v1049 = vmax.f32 %v1017, 0.0
        %v1050 = vmax.f32 %v1020, 0.0
        %v1051 = vmax.f32 %v1025, 0.0
        %v1052 = vmax.f32 %v1028, 0.0
        %v1053 = vmax.f32 %v1033, 0.0
        %v1054 = vmax.f32 %v1036, 0.0
        %v1055 = vpack.c.bf16 %v1040, %v1039
        %v1056 = vpack.c.bf16 %v1042, %v1041
        %v1057 = vpack.c.bf16 %v1044, %v1043
        %v1058 = vpack.c.bf16 %v1046, %v1045
        %v1059 = vpack.c.bf16 %v1048, %v1047
        %v1060 = vpack.c.bf16 %v1050, %v1049
        %v1061 = vpack.c.bf16 %v1052, %v1051
        %v1062 = vpack.c.bf16 %v1054, %v1053
        %1071 = vrot.lane.b32.xlu0 %v1055, 64
        %v1072 = vpop.permute.xlu0 %1071
        %1073 = vrot.lane.b32.xlu0 %v1056, 64
        %v1074 = vpop.permute.xlu0 %1073
        %1075 = vrot.lane.b32.xlu0 %v1057, 64
        %v1076 = vpop.permute.xlu0 %1075
        %1077 = vrot.lane.b32.xlu0 %v1058, 64
        %v1078 = vpop.permute.xlu0 %1077
        %1079 = vrot.lane.b32.xlu0 %v1059, 64
        %v1080 = vpop.permute.xlu0 %1079
        %1081 = vrot.lane.b32.xlu0 %v1060, 64
        %v1082 = vpop.permute.xlu0 %1081
        %1083 = vrot.lane.b32.xlu0 %v1061, 64
        %v1084 = vpop.permute.xlu0 %1083
        %1085 = vrot.lane.b32.xlu0 %v1062, 64
        %v1086 = vpop.permute.xlu0 %1085
        %v1088 = vsel %vm816, %v769, %v1072
        %v1090 = vsel %vm816, %v771, %v1074
        %v1092 = vsel %vm816, %v773, %v1076
        %v1094 = vsel %vm816, %v775, %v1078
        %v1096 = vsel %vm816, %v777, %v1080
        %v1098 = vsel %vm816, %v779, %v1082
        %v1100 = vsel %vm816, %v781, %v1084
        %v1102 = vsel %vm816, %v783, %v1086
        %v1103 = vld [vmem:[%s1 + $0x70] sm:$0xf]
        %v1104 = vld [vmem:[%s1 + $0x74] sm:$0xf]
        %v1105 = vld [vmem:[%s1 + $0x78] sm:$0xf]
        %v1106 = vld [vmem:[%s1 + $0x7c] sm:$0xf]
        %v1107 = vld [vmem:[%s1 + $0x80] sm:$0xf]
        %v1108 = vld [vmem:[%s1 + $0x84] sm:$0xf]
        %v1109 = vld [vmem:[%s1 + $0x88] sm:$0xf]
        %v1110 = vld [vmem:[%s1 + $0x8c] sm:$0xf]
        %v1111 = vld [vmem:[%s1 + $0x90] sm:$0xf]
        %v1112 = vld [vmem:[%s1 + $0x94] sm:$0xf]
        %v1113 = vld [vmem:[%s1 + $0x98] sm:$0xf]
        %v1114 = vld [vmem:[%s1 + $0x9c] sm:$0xf]
        %v1127 = vunpack.c.l.b16 %v1103
        %v1128 = vunpack.c.l.b16 %v1104
        %v1129 = vunpack.c.l.b16 %v1105
        %v1130 = vunpack.c.l.b16 %v1106
        %v1131 = vunpack.c.l.b16 %v1107
        %v1132 = vunpack.c.l.b16 %v1108
        %v1133 = vunpack.c.l.b16 %v1109
        %v1134 = vunpack.c.l.b16 %v1110
        %v1135 = vunpack.c.l.b16 %v1111
        %v1136 = vunpack.c.l.b16 %v1112
        %v1137 = vunpack.c.l.b16 %v1113
        %v1138 = vunpack.c.l.b16 %v1114
        %v1139 = vpack.c.b16 %v1128, %v1127
        %v1140 = vpack.c.b16 %v1130, %v1129
        %v1141 = vpack.c.b16 %v1132, %v1131
        %v1142 = vpack.c.b16 %v1134, %v1133
        %v1143 = vpack.c.b16 %v1136, %v1135
        %v1144 = vpack.c.b16 %v1138, %v1137
        %vm1151 = vcmask 785408
        %v1152 = vsel %vm1151, %v1088, 0
        %v1154 = vsel %vm1151, %v1090, 0
        %v1156 = vsel %vm1151, %v1092, 0
        %v1158 = vsel %vm1151, %v1094, 0
        %v1160 = vsel %vm1151, %v1096, 0
        %v1162 = vsel %vm1151, %v1098, 0
        %v1164 = vsel %vm1151, %v1100, 0
        %v1166 = vsel %vm1151, %v1102, 0
        %1168 = vmatprep.subr.bf16.mxu0 0
        %1169 = vmatpush1.bf16.msra.mxu0 %v1139
        %1170 = vmatprep.subr.bf16.mxu0 0
        %1171 = vmatpush1.bf16.msra.mxu0 %v1140
        %1172 = vmatprep.subr.bf16.mxu0 0
        %1173 = vmatpush1.bf16.msra.mxu0 %v1141
        %1174 = vmatprep.subr.bf16.mxu0 0
        %1175 = vmatpush1.bf16.msra.mxu0 %v1142
        %1176 = vmatprep.subr.bf16.mxu0 0
        %1177 = vmatpush1.bf16.msra.mxu0 %v1143
        %1178 = vmatprep.subr.bf16.mxu0 0
        %1179 = vmatpush1.bf16.msra.mxu0 %v1144
        %1180 = vmatprep.subr.bf16.mxu0 0
        %1181 = vmatpush1.bf16.msra.mxu0 0
        %1182 = vmatprep.subr.bf16.mxu0 0
        %1183 = vmatpush1.bf16.msra.mxu0 0
        %1184 = vmatprep.subr.bf16.mxu0 0
        %1185 = vmatpush1.bf16.msra.mxu0 0
        %1186 = vmatprep.subr.bf16.mxu0 0
        %1187 = vmatpush1.bf16.msra.mxu0 0
        %1188 = vmatprep.subr.bf16.mxu0 0
        %1189 = vmatpush1.bf16.msra.mxu0 0
        %1190 = vmatprep.subr.bf16.mxu0 0
        %1191 = vmatpush1.bf16.msra.mxu0 0
        %1192 = vmatprep.subr.bf16.mxu0 0
        %1193 = vmatpush1.bf16.msra.mxu0 0
        %1194 = vmatprep.subr.bf16.mxu0 0
        %1195 = vmatpush1.bf16.msra.mxu0 0
        %1196 = vmatprep.subr.bf16.mxu0 0
        %1197 = vmatpush1.bf16.msra.mxu0 0
        %1198 = vmatprep.subr.bf16.mxu0 0
        %1199 = vmatpush1.bf16.msra.mxu0 0
        %1200 = vmatprep.mubr.bf16.mxu0 0
        %1201 = vmatmul.mubr.bf16.gmra.mrb[0].mxu0 %v1152
        %v1202 = vpop.f32.mrb[0].mxu0
        %v1203 = vadd.f32 0.0, %v1202
        %v1204 = vpop.f32.mrb[0].mxu0
        %v1205 = vpop.f32.mrb[0].mxu0
        %v1206 = vadd.f32 0.0, %v1205
        %v1207 = vpop.f32.mrb[0].mxu0
        %1208 = vmatprep.mubr.bf16.mxu0 0
        %1209 = vmatmul.mubr.bf16.gmra.mrb[0].mxu0 %v1154
        %v1210 = vpop.f32.mrb[0].mxu0
        %v1211 = vadd.f32 0.0, %v1210
        %v1212 = vpop.f32.mrb[0].mxu0
        %v1213 = vpop.f32.mrb[0].mxu0
        %v1214 = vadd.f32 0.0, %v1213
        %v1215 = vpop.f32.mrb[0].mxu0
        %1216 = vmatprep.mubr.bf16.mxu0 0
        %1217 = vmatmul.mubr.bf16.gmra.mrb[0].mxu0 %v1156
        %v1218 = vpop.f32.mrb[0].mxu0
        %v1219 = vadd.f32 0.0, %v1218
        %v1220 = vpop.f32.mrb[0].mxu0
        %v1221 = vpop.f32.mrb[0].mxu0
        %v1222 = vadd.f32 0.0, %v1221
        %v1223 = vpop.f32.mrb[0].mxu0
        %1224 = vmatprep.mubr.bf16.mxu0 0
        %1225 = vmatmul.mubr.bf16.gmra.mrb[0].mxu0 %v1158
        %v1226 = vpop.f32.mrb[0].mxu0
        %v1227 = vadd.f32 0.0, %v1226
        %v1228 = vpop.f32.mrb[0].mxu0
        %v1229 = vpop.f32.mrb[0].mxu0
        %v1230 = vadd.f32 0.0, %v1229
        %v1231 = vpop.f32.mrb[0].mxu0
        %1232 = vmatprep.mubr.bf16.mxu0 0
        %1233 = vmatmul.mubr.bf16.gmra.mrb[0].mxu0 %v1160
        %v1234 = vpop.f32.mrb[0].mxu0
        %v1235 = vadd.f32 0.0, %v1234
        %v1236 = vpop.f32.mrb[0].mxu0
        %v1237 = vpop.f32.mrb[0].mxu0
        %v1238 = vadd.f32 0.0, %v1237
        %v1239 = vpop.f32.mrb[0].mxu0
        %1240 = vmatprep.mubr.bf16.mxu0 0
        %1241 = vmatmul.mubr.bf16.gmra.mrb[0].mxu0 %v1162
        %v1242 = vpop.f32.mrb[0].mxu0
        %v1243 = vadd.f32 0.0, %v1242
        %v1244 = vpop.f32.mrb[0].mxu0
        %v1245 = vpop.f32.mrb[0].mxu0
        %v1246 = vadd.f32 0.0, %v1245
        %v1247 = vpop.f32.mrb[0].mxu0
        %1248 = vmatprep.mubr.bf16.mxu0 0
        %1249 = vmatmul.mubr.bf16.gmra.mrb[0].mxu0 %v1164
        %v1250 = vpop.f32.mrb[0].mxu0
        %v1251 = vadd.f32 0.0, %v1250
        %v1252 = vpop.f32.mrb[0].mxu0
        %v1253 = vpop.f32.mrb[0].mxu0
        %v1254 = vadd.f32 0.0, %v1253
        %v1255 = vpop.f32.mrb[0].mxu0
        %1256 = vmatprep.mubr.bf16.mxu0 0
        %1257 = vmatmul.mubr.bf16.gmra.mrb[0].mxu0 %v1166
        %v1258 = vpop.f32.mrb[0].mxu0
        %v1259 = vadd.f32 0.0, %v1258
        %v1260 = vpop.f32.mrb[0].mxu0
        %v1261 = vpop.f32.mrb[0].mxu0
        %v1262 = vadd.f32 0.0, %v1261
        %v1263 = vpop.f32.mrb[0].mxu0
        %1264 = vdwg.mxu0
        %v1265 = vpack.c.bf16 %v1206, %v1203
        %v1266 = vpack.c.bf16 %v1214, %v1211
        %v1267 = vpack.c.bf16 %v1222, %v1219
        %v1268 = vpack.c.bf16 %v1230, %v1227
        %v1269 = vpack.c.bf16 %v1238, %v1235
        %v1270 = vpack.c.bf16 %v1246, %v1243
        %v1271 = vpack.c.bf16 %v1254, %v1251
        %v1272 = vpack.c.bf16 %v1262, %v1259
        %v1273 = vlaneseq
        %v1274 = vshrl.u32 %v1273, 7
        %v1275 = vsub.s32 3, %v1274
        %v1276 = vrot.slane %v203, %v1275
        %1277 = vmatprep.subr.bf16.mxu0 0
        %1278 = vmatpush1.bf16.msra.mxu0 %v1265
        %1279 = vmatprep.subr.bf16.mxu0 0
        %1280 = vmatpush1.bf16.msra.mxu0 %v1266
        %1281 = vmatprep.subr.bf16.mxu0 0
        %1282 = vmatpush1.bf16.msra.mxu0 %v1267
        %1283 = vmatprep.subr.bf16.mxu0 0
        %1284 = vmatpush1.bf16.msra.mxu0 %v1268
        %1285 = vmatprep.subr.bf16.mxu0 0
        %1286 = vmatpush1.bf16.msra.mxu0 %v1269
        %1287 = vmatprep.subr.bf16.mxu0 0
        %1288 = vmatpush1.bf16.msra.mxu0 %v1270
        %1289 = vmatprep.subr.bf16.mxu0 0
        %1290 = vmatpush1.bf16.msra.mxu0 %v1271
        %1291 = vmatprep.subr.bf16.mxu0 0
        %1292 = vmatpush1.bf16.msra.mxu0 %v1272
        %1293 = vmatprep.subr.bf16.mxu0 0
        %1294 = vmatpush1.bf16.msra.mxu0 0
        %1295 = vmatprep.subr.bf16.mxu0 0
        %1296 = vmatpush1.bf16.msra.mxu0 0
        %1297 = vmatprep.subr.bf16.mxu0 0
        %1298 = vmatpush1.bf16.msra.mxu0 0
        %1299 = vmatprep.subr.bf16.mxu0 0
        %1300 = vmatpush1.bf16.msra.mxu0 0
        %1301 = vmatprep.subr.bf16.mxu0 0
        %1302 = vmatpush1.bf16.msra.mxu0 0
        %1303 = vmatprep.subr.bf16.mxu0 0
        %1304 = vmatpush1.bf16.msra.mxu0 0
        %1305 = vmatprep.subr.bf16.mxu0 0
        %1306 = vmatpush1.bf16.msra.mxu0 0
        %1307 = vmatprep.subr.bf16.mxu0 0
        %1308 = vmatpush1.bf16.msra.mxu0 0
        %1309 = vmatprep.mubr.bf16.mxu0 0
        %1310 = vmatmul.mubr.bf16.gmra.mrb[0].mxu0 %v607
        %v1311 = vpop.f32.mrb[0].mxu0
        %v1312 = vadd.f32 %v1276, %v1311
        %v1313 = vpop.f32.mrb[0].mxu0
        %v1314 = vpop.f32.mrb[0].mxu0
        %v1315 = vadd.f32 %v1276, %v1314
        %v1316 = vpop.f32.mrb[0].mxu0
        %1317 = vmatprep.mubr.bf16.mxu0 0
        %1318 = vmatmul.mubr.bf16.gmra.mrb[0].mxu0 %v608
        %v1319 = vpop.f32.mrb[0].mxu0
        %v1320 = vadd.f32 %v1276, %v1319
        %v1321 = vpop.f32.mrb[0].mxu0
        %v1322 = vpop.f32.mrb[0].mxu0
        %v1323 = vadd.f32 %v1276, %v1322
        %v1324 = vpop.f32.mrb[0].mxu0
        %1325 = vmatprep.mubr.bf16.mxu0 0
        %1326 = vmatmul.mubr.bf16.gmra.mrb[0].mxu0 %v609
        %v1327 = vpop.f32.mrb[0].mxu0
        %v1328 = vadd.f32 %v1276, %v1327
        %v1329 = vpop.f32.mrb[0].mxu0
        %v1330 = vpop.f32.mrb[0].mxu0
        %v1331 = vadd.f32 %v1276, %v1330
        %v1332 = vpop.f32.mrb[0].mxu0
        %1333 = vmatprep.mubr.bf16.mxu0 0
        %1334 = vmatmul.mubr.bf16.gmra.mrb[0].mxu0 %v610
        %v1335 = vpop.f32.mrb[0].mxu0
        %v1336 = vadd.f32 %v1276, %v1335
        %v1337 = vpop.f32.mrb[0].mxu0
        %v1338 = vpop.f32.mrb[0].mxu0
        %v1339 = vadd.f32 %v1276, %v1338
        %v1340 = vpop.f32.mrb[0].mxu0
        %1341 = vmatprep.mubr.bf16.mxu0 0
        %1342 = vmatmul.mubr.bf16.gmra.mrb[0].mxu0 %v611
        %v1343 = vpop.f32.mrb[0].mxu0
        %v1344 = vadd.f32 %v1276, %v1343
        %v1345 = vpop.f32.mrb[0].mxu0
        %v1346 = vpop.f32.mrb[0].mxu0
        %v1347 = vadd.f32 %v1276, %v1346
        %v1348 = vpop.f32.mrb[0].mxu0
        %1349 = vmatprep.mubr.bf16.mxu0 0
        %1350 = vmatmul.mubr.bf16.gmra.mrb[0].mxu0 %v612
        %v1351 = vpop.f32.mrb[0].mxu0
        %v1352 = vadd.f32 %v1276, %v1351
        %v1353 = vpop.f32.mrb[0].mxu0
        %v1354 = vpop.f32.mrb[0].mxu0
        %v1355 = vadd.f32 %v1276, %v1354
        %v1356 = vpop.f32.mrb[0].mxu0
        %1357 = vmatprep.mubr.bf16.mxu0 0
        %1358 = vmatmul.mubr.bf16.gmra.mrb[0].mxu0 %v613
        %v1359 = vpop.f32.mrb[0].mxu0
        %v1360 = vadd.f32 %v1276, %v1359
        %v1361 = vpop.f32.mrb[0].mxu0
        %v1362 = vpop.f32.mrb[0].mxu0
        %v1363 = vadd.f32 %v1276, %v1362
        %v1364 = vpop.f32.mrb[0].mxu0
        %1365 = vmatprep.mubr.bf16.mxu0 0
        %1366 = vmatmul.mubr.bf16.gmra.mrb[0].mxu0 %v614
        %v1367 = vpop.f32.mrb[0].mxu0
        %v1368 = vadd.f32 %v1276, %v1367
        %v1369 = vpop.f32.mrb[0].mxu0
        %v1370 = vpop.f32.mrb[0].mxu0
        %v1371 = vadd.f32 %v1276, %v1370
        %v1372 = vpop.f32.mrb[0].mxu0
        %1373 = vdwg.mxu0
        %v1374 = vmax.f32 %v1312, 0.0
        %v1375 = vmax.f32 %v1315, 0.0
        %v1376 = vmax.f32 %v1320, 0.0
        %v1377 = vmax.f32 %v1323, 0.0
        %v1378 = vmax.f32 %v1328, 0.0
        %v1379 = vmax.f32 %v1331, 0.0
        %v1380 = vmax.f32 %v1336, 0.0
        %v1381 = vmax.f32 %v1339, 0.0
        %v1382 = vmax.f32 %v1344, 0.0
        %v1383 = vmax.f32 %v1347, 0.0
        %v1384 = vmax.f32 %v1352, 0.0
        %v1385 = vmax.f32 %v1355, 0.0
        %v1386 = vmax.f32 %v1360, 0.0
        %v1387 = vmax.f32 %v1363, 0.0
        %v1388 = vmax.f32 %v1368, 0.0
        %v1389 = vmax.f32 %v1371, 0.0
        %v1390 = vpack.c.bf16 %v1375, %v1374
        %v1391 = vpack.c.bf16 %v1377, %v1376
        %v1392 = vpack.c.bf16 %v1379, %v1378
        %v1393 = vpack.c.bf16 %v1381, %v1380
        %v1394 = vpack.c.bf16 %v1383, %v1382
        %v1395 = vpack.c.bf16 %v1385, %v1384
        %v1396 = vpack.c.bf16 %v1387, %v1386
        %v1397 = vpack.c.bf16 %v1389, %v1388
        %1406 = vrot.lane.b32.xlu0 %v1390, 96
        %v1407 = vpop.permute.xlu0 %1406
        %1408 = vrot.lane.b32.xlu0 %v1391, 96
        %v1409 = vpop.permute.xlu0 %1408
        %1410 = vrot.lane.b32.xlu0 %v1392, 96
        %v1411 = vpop.permute.xlu0 %1410
        %1412 = vrot.lane.b32.xlu0 %v1393, 96
        %v1413 = vpop.permute.xlu0 %1412
        %1414 = vrot.lane.b32.xlu0 %v1394, 96
        %v1415 = vpop.permute.xlu0 %1414
        %1416 = vrot.lane.b32.xlu0 %v1395, 96
        %v1417 = vpop.permute.xlu0 %1416
        %1418 = vrot.lane.b32.xlu0 %v1396, 96
        %v1419 = vpop.permute.xlu0 %1418
        %1420 = vrot.lane.b32.xlu0 %v1397, 96
        %v1421 = vpop.permute.xlu0 %1420
        %v1423 = vsel %vm1151, %v1088, %v1407
        %v1426 = vsel %vm1151, %v1090, %v1409
        %v1429 = vsel %vm1151, %v1092, %v1411
        %v1432 = vsel %vm1151, %v1094, %v1413
        %v1435 = vsel %vm1151, %v1096, %v1415
        %v1438 = vsel %vm1151, %v1098, %v1417
        %v1441 = vsel %vm1151, %v1100, %v1419
        %v1444 = vsel %vm1151, %v1102, %v1421
        %1446 = vmatprep.subr.bf16.mxu0 0
        %1447 = vmatpush1.bf16.msra.mxu0 %v1423
        %1448 = vmatprep.subr.bf16.mxu0 0
        %1449 = vmatpush1.bf16.msra.mxu0 %v1426
        %1450 = vmatprep.subr.bf16.mxu0 0
        %1451 = vmatpush1.bf16.msra.mxu0 %v1429
        %1452 = vmatprep.subr.bf16.mxu0 0
        %1453 = vmatpush1.bf16.msra.mxu0 %v1432
        %1454 = vmatprep.subr.bf16.mxu0 0
        %1455 = vmatpush1.bf16.msra.mxu0 %v1435
        %1456 = vmatprep.subr.bf16.mxu0 0
        %1457 = vmatpush1.bf16.msra.mxu0 %v1438
        %1458 = vmatprep.subr.bf16.mxu0 0
        %1459 = vmatpush1.bf16.msra.mxu0 %v1441
        %1460 = vmatprep.subr.bf16.mxu0 0
        %1461 = vmatpush1.bf16.msra.mxu0 %v1444
        %1462 = vmatprep.subr.bf16.mxu0 0
        %1463 = vmatpush1.bf16.msra.mxu0 0
        %1464 = vmatprep.subr.bf16.mxu0 0
        %1465 = vmatpush1.bf16.msra.mxu0 0
        %1466 = vmatprep.subr.bf16.mxu0 0
        %1467 = vmatpush1.bf16.msra.mxu0 0
        %1468 = vmatprep.subr.bf16.mxu0 0
        %1469 = vmatpush1.bf16.msra.mxu0 0
        %1470 = vmatprep.subr.bf16.mxu0 0
        %1471 = vmatpush1.bf16.msra.mxu0 0
        %1472 = vmatprep.subr.bf16.mxu0 0
        %1473 = vmatpush1.bf16.msra.mxu0 0
        %1474 = vmatprep.subr.bf16.mxu0 0
        %1475 = vmatpush1.bf16.msra.mxu0 0
        %1476 = vmatprep.subr.bf16.mxu0 0
        %1477 = vmatpush1.bf16.msra.mxu0 0
        %1478 = vmatprep.mubr.bf16.mxu0 0
        %1479 = vmatmul.mubr.bf16.gmra.mrb[0].mxu0 %v202
        %v1480 = vpop.f32.mrb[0].mxu0
        %v1481 = vadd.f32 0.0, %v1480
        %v1482 = vpop.f32.mrb[0].mxu0
        %v1483 = vpop.f32.mrb[0].mxu0
        %v1484 = vpop.f32.mrb[0].mxu0
        %1485 = vdwg.mxu0
        %v1486 = vpack.c.bf16 %v1481, %v1481
        %v1487 = vld [vmem:[%s1 + $0xa0] sm:$0xf]
        %v1488 = vld [vmem:[%s1 + $0xa4] sm:$0xf]
        %v1489 = vld [vmem:[%s1 + $0xa8] sm:$0xf]
        %v1490 = vld [vmem:[%s1 + $0xac] sm:$0xf]
        %v1491 = vld [vmem:[%s1 + $0xb0] sm:$0xf]
        %v1492 = vld [vmem:[%s1 + $0xb4] sm:$0xf]
        %v1493 = vld [vmem:[%s1 + $0xb8] sm:$0xf]
        %v1494 = vld [vmem:[%s1 + $0xbc] sm:$0xf]
        %v1495 = vld [vmem:[%s1 + $0xc0] sm:$0xf]
        %v1496 = vld [vmem:[%s1 + $0xc4] sm:$0xf]
        %v1497 = vld [vmem:[%s1 + $0xc8] sm:$0xf]
        %v1498 = vld [vmem:[%s1 + $0xcc] sm:$0xf]
        %v1499 = vld [vmem:[%s1 + $0xd0] sm:$0xf]
        %v1500 = vld [vmem:[%s1 + $0xd4] sm:$0xf]
        %v1501 = vld [vmem:[%s1 + $0xd8] sm:$0xf]
        %v1502 = vld [vmem:[%s1 + $0xdc] sm:$0xf]
        %v1503 = vlaneseq
        %v1504 = vshrl.u32 %v1503, 7
        %v1505 = vsub.s32 4, %v1504
        %v1506 = vrot.slane %v203, %v1505
        %v1523 = vunpack.c.l.b16 %v1487
        %v1524 = vunpack.c.l.b16 %v1488
        %v1525 = vunpack.c.l.b16 %v1489
        %v1526 = vunpack.c.l.b16 %v1490
        %v1527 = vunpack.c.l.b16 %v1491
        %v1528 = vunpack.c.l.b16 %v1492
        %v1529 = vunpack.c.l.b16 %v1493
        %v1530 = vunpack.c.l.b16 %v1494
        %v1531 = vunpack.c.l.b16 %v1495
        %v1532 = vunpack.c.l.b16 %v1496
        %v1533 = vunpack.c.l.b16 %v1497
        %v1534 = vunpack.c.l.b16 %v1498
        %v1535 = vunpack.c.l.b16 %v1499
        %v1536 = vunpack.c.l.b16 %v1500
        %v1537 = vunpack.c.l.b16 %v1501
        %v1538 = vunpack.c.l.b16 %v1502
        %v1539 = vpack.c.b16 %v1524, %v1523
        %v1540 = vpack.c.b16 %v1526, %v1525
        %v1541 = vpack.c.b16 %v1528, %v1527
        %v1542 = vpack.c.b16 %v1530, %v1529
        %v1543 = vpack.c.b16 %v1532, %v1531
        %v1544 = vpack.c.b16 %v1534, %v1533
        %v1545 = vpack.c.b16 %v1536, %v1535
        %v1546 = vpack.c.b16 %v1538, %v1537
        %1555 = vmatprep.subr.bf16.mxu0 0
        %1556 = vmatpush1.bf16.msra.mxu0 %v1539
        %1557 = vmatprep.subr.bf16.mxu0 0
        %1558 = vmatpush1.bf16.msra.mxu0 %v1540
        %1559 = vmatprep.subr.bf16.mxu0 0
        %1560 = vmatpush1.bf16.msra.mxu0 %v1541
        %1561 = vmatprep.subr.bf16.mxu0 0
        %1562 = vmatpush1.bf16.msra.mxu0 %v1542
        %1563 = vmatprep.subr.bf16.mxu0 0
        %1564 = vmatpush1.bf16.msra.mxu0 %v1543
        %1565 = vmatprep.subr.bf16.mxu0 0
        %1566 = vmatpush1.bf16.msra.mxu0 %v1544
        %1567 = vmatprep.subr.bf16.mxu0 0
        %1568 = vmatpush1.bf16.msra.mxu0 %v1545
        %1569 = vmatprep.subr.bf16.mxu0 0
        %1570 = vmatpush1.bf16.msra.mxu0 %v1546
        %1571 = vmatprep.subr.bf16.mxu0 0
        %1572 = vmatpush1.bf16.msra.mxu0 0
        %1573 = vmatprep.subr.bf16.mxu0 0
        %1574 = vmatpush1.bf16.msra.mxu0 0
        %1575 = vmatprep.subr.bf16.mxu0 0
        %1576 = vmatpush1.bf16.msra.mxu0 0
        %1577 = vmatprep.subr.bf16.mxu0 0
        %1578 = vmatpush1.bf16.msra.mxu0 0
        %1579 = vmatprep.subr.bf16.mxu0 0
        %1580 = vmatpush1.bf16.msra.mxu0 0
        %1581 = vmatprep.subr.bf16.mxu0 0
        %1582 = vmatpush1.bf16.msra.mxu0 0
        %1583 = vmatprep.subr.bf16.mxu0 0
        %1584 = vmatpush1.bf16.msra.mxu0 0
        %1585 = vmatprep.subr.bf16.mxu0 0
        %1586 = vmatpush1.bf16.msra.mxu0 0
        %1587 = vmatprep.mubr.bf16.mxu0 0
        %1588 = vmatmul.mubr.bf16.gmra.mrb[0].mxu0 %v1486
        %v1589 = vpop.f32.mrb[0].mxu0
        %v1590 = vadd.f32 %v1506, %v1589
        %v1591 = vpop.f32.mrb[0].mxu0
        %v1592 = vpop.f32.mrb[0].mxu0
        %v1593 = vpop.f32.mrb[0].mxu0
        %1594 = vdwg.mxu0
        %vm1595 = vcmp.gt.f32.partialorder %v1590, 0.0
        %v1596 = vmul.f32 %v1590, 0.1
        %v1597 = vsel %vm1595, %v1590, %v1596
        %v1598 = vpack.c.bf16 %v1597, %v1597
        %v1599 = vld [vmem:[%s1 + $0xe0] sm:$0xf]
        %v1600 = vld [vmem:[%s1 + $0xe4] sm:$0xf]
        %v1601 = vld [vmem:[%s1 + $0xe8] sm:$0xf]
        %v1602 = vld [vmem:[%s1 + $0xec] sm:$0xf]
        %v1603 = vlaneseq
        %v1604 = vshrl.u32 %v1603, 7
        %v1605 = vsub.s32 5, %v1604
        %v1606 = vrot.slane %v203, %v1605
        %v1611 = vunpack.c.l.b16 %v1599
        %v1612 = vunpack.c.l.b16 %v1600
        %v1613 = vunpack.c.l.b16 %v1601
        %v1614 = vunpack.c.l.b16 %v1602
        %v1615 = vpack.c.b16 %v1612, %v1611
        %v1616 = vpack.c.b16 %v1614, %v1613
        %v1620 = vsel %vm441, %v1598, 0
        %1622 = vmatprep.subr.bf16.mxu0 0
        %1623 = vmatpush1.bf16.msra.mxu0 %v1615
        %1624 = vmatprep.subr.bf16.mxu0 0
        %1625 = vmatpush1.bf16.msra.mxu0 %v1616
        %1626 = vmatprep.subr.bf16.mxu0 0
        %1627 = vmatpush1.bf16.msra.mxu0 0
        %1628 = vmatprep.subr.bf16.mxu0 0
        %1629 = vmatpush1.bf16.msra.mxu0 0
        %1630 = vmatprep.subr.bf16.mxu0 0
        %1631 = vmatpush1.bf16.msra.mxu0 0
        %1632 = vmatprep.subr.bf16.mxu0 0
        %1633 = vmatpush1.bf16.msra.mxu0 0
        %1634 = vmatprep.subr.bf16.mxu0 0
        %1635 = vmatpush1.bf16.msra.mxu0 0
        %1636 = vmatprep.subr.bf16.mxu0 0
        %1637 = vmatpush1.bf16.msra.mxu0 0
        %1638 = vmatprep.subr.bf16.mxu0 0
        %1639 = vmatpush1.bf16.msra.mxu0 0
        %1640 = vmatprep.subr.bf16.mxu0 0
        %1641 = vmatpush1.bf16.msra.mxu0 0
        %1642 = vmatprep.subr.bf16.mxu0 0
        %1643 = vmatpush1.bf16.msra.mxu0 0
        %1644 = vmatprep.subr.bf16.mxu0 0
        %1645 = vmatpush1.bf16.msra.mxu0 0
        %1646 = vmatprep.subr.bf16.mxu0 0
        %1647 = vmatpush1.bf16.msra.mxu0 0
        %1648 = vmatprep.subr.bf16.mxu0 0
        %1649 = vmatpush1.bf16.msra.mxu0 0
        %1650 = vmatprep.subr.bf16.mxu0 0
        %1651 = vmatpush1.bf16.msra.mxu0 0
        %1652 = vmatprep.subr.bf16.mxu0 0
        %1653 = vmatpush1.bf16.msra.mxu0 0
        %1654 = vmatprep.mubr.bf16.mxu0 0
        %1655 = vmatmul.mubr.bf16.gmra.mrb[0].mxu0 %v1620
        %v1656 = vpop.f32.mrb[0].mxu0
        %v1657 = vadd.f32 %v1606, %v1656
        %v1658 = vpop.f32.mrb[0].mxu0
        %v1659 = vpop.f32.mrb[0].mxu0
        %v1660 = vpop.f32.mrb[0].mxu0
        %1661 = vdwg.mxu0
        %v1662 = vlaneseq
        %v1663 = vand.u32 %v1662, 127
        %vm1664 = vcmp.lt.s32.totalorder %v1663, 4
        %v1665 = vsel %vm1664, %v1657, -1e+30
        %v1666 = vsel %vm441, %v1665, -inf
        %1667 = vmax.xlane.f32.xlu0 %v1666
        %v1668 = vpop.xlane.xlu0 %1667
        %v1669 = vsub.f32 %v1665, %v1668
        %v1670 = vmul.f32 %v1669, 1.442695
        %v1671 = vpow.pop %v1670
        %v1672 = vsel %vm441, %v1671, 0.0
        %1673 = vadd.xlane.f32.xlu0 %v1672
        %v1674 = vpop.xlane.xlu0 %1673
        %v1675 = vlog2.pop %v1674
        %v1676 = vmul.f32 %v1675, 0.6931472
        %v1677 = vadd.f32 %v1668, %v1676
        %v1678 = vsub.f32 %v1665, %v1677
        %1679 = vst.msk [vmem:[%s163] sm:$0xff] %vm441, %v1678
        %s1680 = sand.u32 %s93, 1
        %s1681 = scalar_lea.sflag [#allocation3], %s1680
        %s1682 = sand.u32 %s93, 1
        %s1683 = smul.addr %s1682, 8
        %s1684 = scalar_lea.vmem [#allocation2], %s1683
        // Predicated region
        $region33: #{tpu_custom_call.1} parent=31 // pred_check
          %p1685 = pneg %p103
        $region34: #{tpu_custom_call.1} parent=31 // pred_check_branch
          %1687 = sbr.rel (%p1685) target = $region36
        $region35: #{tpu_custom_call.1} parent=31 // pred_region
          %s1689 = ssub.s32 128, 128
          %1690 = vsyncadd %s1681, %s1689
          %s1691 = smul.addr %s17, 128
          %s1692 = scalar_lea.hbm %s3, %s1691
          %s1694 = sshll.u32 %s1684, 4
          %s1695 = int_to_ptr.vmem [resolvable:$true] %s1694
          %1697 = dma.vmem_to_hbm [thread:$0]  %s1695, 128, %s1692, %s1681
        $region36: #{tpu_custom_call.1} parent=31 // pred_fallthru
          _
      $region32: #{tpu_custom_call.1} parent=5 // pred_fallthru
        _
      %p1698 = scmp.le.s32.totalorder 2, %s12
      // Predicated region
      $region37: #{tpu_custom_call.1} parent=5 // pred_check
        %p1699 = pneg %p1698
      $region38: #{tpu_custom_call.1} parent=5 // pred_check_branch
        %1701 = sbr.rel (%p1699) target = $region40
      $region39: #{tpu_custom_call.1} parent=5 // pred_region
        %s1702 = ssub.s32 %s12, 2
        // Predicated region
        $region41: #{tpu_custom_call.1} parent=39 // pred_check
          %p1703 = pneg %p109
        $region42: #{tpu_custom_call.1} parent=39 // pred_check_branch
          %1705 = sbr.rel (%p1703) target = $region44
        $region43: #{tpu_custom_call.1} parent=39 // pred_region
          %s1706 = sand.u32 %s94, 1
          %s1707 = scalar_lea.sflag [#allocation3], %s1706
          %s1708 = sand.u32 %s94, 1
          %s1709 = smul.addr %s1708, 8
          %s1710 = scalar_lea.vmem [#allocation2], %s1709
          %1711 = dma.done %s1707, 128
        $region44: #{tpu_custom_call.1} parent=39 // pred_fallthru
          _
      $region40: #{tpu_custom_call.1} parent=5 // pred_fallthru
        _
    $region6: #{tpu_custom_call.1} parent=1 // loop_footer
      %s16 = sadd.s32 1, %s12
    $region7: #{tpu_custom_call.1} parent=1 // loop_footer_branch
      %11 = sbr.rel target = $region3
    $region8: #{tpu_custom_call.1} parent=1 // loop_exit
      _
    %1712 = vsyncpa [#allocation3], 1
    %s1713 = scalar_lea.sflag [#allocation3], 1
    %1714 = vsyncpa %s1713, 1

</llo_original>
